<compile_context>
chip_gen: v7x
topology: tpu7x:2x2x1
jax: 0.10.0
libtpu: 0.0.40
codegen_flags: <defaults>
</compile_context>

<pallas_src>
import functools

import jax
import jax.numpy as jnp
from jax.experimental import pallas as pl
from jax.experimental.pallas import tpu as pltpu

EPS = 1e-5  # PyTorch nn.LayerNorm default


def _layernorm(x, gamma, beta):
    mu = jnp.mean(x, axis=-1, keepdims=True)
    var = jnp.mean((x - mu) ** 2, axis=-1, keepdims=True)
    return (x - mu) * jax.lax.rsqrt(var + EPS) * gamma + beta


# ---------------------------------------------------------------------------
# Fused kernel: one transformer layer applied to a block of G patches.
# Grid = (patch-block g [parallel], layer l [arbitrary]); the output block is
# resident across l, so it carries the activations between layers.
# ---------------------------------------------------------------------------
def transformer_layer_kernel(x_ref, g1_ref, b1_ref, wqkv_ref, wo_ref, bo_ref,
                             g2_ref, b2_ref, w1_ref, bb1_ref, w2_ref, bb2_ref,
                             o_ref, *, heads, dim_head):
    layer = pl.program_id(1)

    # First layer: seed the resident activation tile from the input block.
    @pl.when(layer == 0)
    def _():
        o_ref[...] = x_ref[...]

    x = o_ref[...].astype(jnp.float32)              # (G, N, D) current activations
    G, N, D = x.shape
    R = G * N
    inner = heads * dim_head
    E = dim_head
    scale = dim_head ** -0.5

    # ----------------- PreNorm + multi-head self-attention + residual --------
    xn = _layernorm(x, g1_ref[0, 0], b1_ref[0, 0])            # f32 stats
    xn_rows = xn.reshape(R, D)                                # row-flattened view
    wqkv = wqkv_ref[0]                                        # (D, 3*inner)
    wo = wo_ref[0]                                            # (inner, D)

    # One big 2-D MXU matmul for all G patches at once.
    qkv = jnp.dot(xn_rows, wqkv, preferred_element_type=jnp.float32)  # (R, 3*inner)

    attn_rows = jnp.zeros((R, D), jnp.float32)
    for h in range(heads):                                    # static unroll (small)
        q = qkv[:, h * E:(h + 1) * E].reshape(G, N, E)
        k = qkv[:, inner + h * E: inner + (h + 1) * E].reshape(G, N, E)
        v = qkv[:, 2 * inner + h * E: 2 * inner + (h + 1) * E].reshape(G, N, E)

        s = jnp.einsum('gne,gme->gnm', q, k,
                       preferred_element_type=jnp.float32) * scale     # (G, N, N)
        s = s - jnp.max(s, axis=-1, keepdims=True)
        p = jnp.exp(s)
        # Softmax denominator via approximate reciprocal on the EUP slot.
        p = p * pl.reciprocal(jnp.sum(p, axis=-1, keepdims=True), approx=True)

        oh = jnp.einsum('gnm,gme->gne', p, v,
                        preferred_element_type=jnp.float32)            # (G, N, E)
        # Fold the output projection per head (== concat(heads) @ Wo), avoiding
        # a lane-concatenate relayout.
        attn_rows = attn_rows + jnp.dot(
            oh.reshape(R, E), wo[h * E:(h + 1) * E, :],
            preferred_element_type=jnp.float32)

    x = x + (attn_rows + bo_ref[0, 0]).reshape(G, N, D)       # residual add

    # ----------------- PreNorm + (Linear -> SiLU -> Linear) + residual -------
    xn2 = _layernorm(x, g2_ref[0, 0], b2_ref[0, 0]).reshape(R, D)
    h1 = jnp.dot(xn2, w1_ref[0], preferred_element_type=jnp.float32) + bb1_ref[0, 0]
    h1 = h1 * jax.nn.sigmoid(h1)                              # SiLU in f32
    y = jnp.dot(h1, w2_ref[0], preferred_element_type=jnp.float32) + bb2_ref[0, 0]
    x = x + y.reshape(G, N, D)                                # residual add

    o_ref[...] = x.astype(o_ref.dtype)


# ---------------------------------------------------------------------------
# Block-size selection: as many patches per program as a modest VMEM budget
# allows, while keeping >= 2 grid blocks so both v7x TensorCores get work.
# ---------------------------------------------------------------------------
def _choose_group(total, n, d, inner, mlp_dim, heads, vmem_budget=4 << 20):
    # rough f32 working-set per patch (x, xn, qkv, mlp hidden, scores) x headroom
    per_patch = 4 * n * (4 * d + 3 * inner + mlp_dim + heads * n) * 3
    cap = max(1, vmem_budget // per_patch)
    divisors = [g for g in range(1, total + 1) if total % g == 0 and g <= cap]
    if not divisors:
        divisors = [1]
    multi = [g for g in divisors if total // g >= 2]
    return max(multi) if multi else max(divisors)


# ---------------------------------------------------------------------------
# Wrapper
# ---------------------------------------------------------------------------
def transformer3d_forward(x, params, *, heads, dim_head, group=None):
    """x: [B, P, N, D]; params: list of (attn_params, ff_params) per layer."""
    B, P, N, D = x.shape
    depth = len(params)
    inner = heads * dim_head
    total = B * P
    xf = x.reshape(total, N, D)

    # Stack per-layer parameters along a leading [depth, ...] axis.
    g1 = jnp.stack([p[0][0] for p in params]).reshape(depth, 1, D)
    b1 = jnp.stack([p[0][1] for p in params]).reshape(depth, 1, D)
    wqkv = jnp.stack([p[0][2] for p in params])                  # (depth, D, 3*inner)
    wo = jnp.stack([p[0][3] for p in params])                    # (depth, inner, D)
    bo = jnp.stack([p[0][4] for p in params]).reshape(depth, 1, D)
    g2 = jnp.stack([p[1][0] for p in params]).reshape(depth, 1, D)
    b2 = jnp.stack([p[1][1] for p in params]).reshape(depth, 1, D)
    w1 = jnp.stack([p[1][2] for p in params])                    # (depth, D, mlp)
    mlp_dim = w1.shape[-1]
    bb1 = jnp.stack([p[1][3] for p in params]).reshape(depth, 1, mlp_dim)
    w2 = jnp.stack([p[1][4] for p in params])                    # (depth, mlp, D)
    bb2 = jnp.stack([p[1][5] for p in params]).reshape(depth, 1, D)

    G = group if group is not None else _choose_group(total, N, D, inner, mlp_dim, heads)
    n_blocks = total // G
    grid = (n_blocks, depth)

    x_spec = pl.BlockSpec((G, N, D), lambda g, l: (g, 0, 0))

    def wspec(*shape):
        # per-layer weight block: indexed by the layer grid coordinate only
        return pl.BlockSpec((1,) + tuple(shape),
                            lambda g, l: (l,) + (0,) * len(shape))

    kernel = functools.partial(transformer_layer_kernel,
                               heads=heads, dim_head=dim_head)

    out = pl.pallas_call(
        kernel,
        out_shape=jax.ShapeDtypeStruct((total, N, D), xf.dtype),
        grid=grid,
        in_specs=[
            x_spec,
            wspec(1, D), wspec(1, D),                 # LN1 gamma/beta
            wspec(D, 3 * inner),                      # Wqkv
            wspec(inner, D), wspec(1, D),             # Wo, bo
            wspec(1, D), wspec(1, D),                 # LN2 gamma/beta
            wspec(D, mlp_dim), wspec(1, mlp_dim),     # W1, b1
            wspec(mlp_dim, D), wspec(1, D),           # W2, b2
        ],
        out_specs=x_spec,
        compiler_params=pltpu.CompilerParams(
            dimension_semantics=("parallel", "arbitrary")),
    )(xf, g1, b1, wqkv, wo, bo, g2, b2, w1, bb1, w2, bb2)

    return out.reshape(B, P, N, D)


# ---------------------------------------------------------------------------
# Pure-JAX reference (for correctness check)
# ---------------------------------------------------------------------------
def transformer3d_ref(x, params, *, heads, dim_head):
    B, P, N, D = x.shape
    inner = heads * dim_head
    scale = dim_head ** -0.5
    for (g1, b1, wqkv, wo, bo), (g2, b2, w1, bb1, w2, bb2) in params:
        xn = _layernorm(x, g1, b1)
        qkv = xn @ wqkv
        q, k, v = jnp.split(qkv, 3, axis=-1)
        sh = lambda t: t.reshape(B, P, N, heads, dim_head).transpose(0, 1, 3, 2, 4)
        q, k, v = sh(q), sh(k), sh(v)
        s = jnp.einsum('bphnd,bphmd->bphnm', q, k) * scale
        a = jax.nn.softmax(s, axis=-1)
        o = jnp.einsum('bphnm,bphmd->bphnd', a, v)
        o = o.transpose(0, 1, 3, 2, 4).reshape(B, P, N, inner)
        x = o @ wo + bo + x
        xn = _layernorm(x, g2, b2)
        h = jax.nn.silu(xn @ w1 + bb1)
        x = h @ w2 + bb2 + x
    return x


# ---------------------------------------------------------------------------
# Deterministic parameter construction
# ---------------------------------------------------------------------------
def make_params(key, depth, dim, heads, dim_head, mlp_dim):
    inner = heads * dim_head
    params = []
    for _ in range(depth):
        key, *ks = jax.random.split(key, 5)
        attn = (
            jnp.ones((dim,), jnp.float32),                                   # LN gamma
            jnp.zeros((dim,), jnp.float32),                                  # LN beta
            0.02 * jax.random.normal(ks[0], (dim, 3 * inner), jnp.float32),  # Wqkv
            0.02 * jax.random.normal(ks[1], (inner, dim), jnp.float32),      # Wo
            jnp.zeros((dim,), jnp.float32),                                  # bo
        )
        ff = (
            jnp.ones((dim,), jnp.float32),                                   # LN gamma
            jnp.zeros((dim,), jnp.float32),                                  # LN beta
            0.02 * jax.random.normal(ks[2], (dim, mlp_dim), jnp.float32),    # W1
            jnp.zeros((mlp_dim,), jnp.float32),                              # b1
            0.02 * jax.random.normal(ks[3], (mlp_dim, dim), jnp.float32),    # W2
            jnp.zeros((dim,), jnp.float32),                                  # b2
        )
        params.append((attn, ff))
    return params


if __name__ == "__main__":
    # Small, MobileViT-3D-consistent shapes: x is (B, P, N, D)
    B, P, N, D = 2, 4, 8, 32
    depth, heads, dim_head, mlp_dim = 2, 2, 16, 64

    key = jax.random.PRNGKey(0)
    kx, kp = jax.random.split(key)
    x = jax.random.normal(kx, (B, P, N, D), jnp.float32)
    params = make_params(kp, depth, D, heads, dim_head, mlp_dim)

    out = transformer3d_forward(x, params, heads=heads, dim_head=dim_head)
    out = jax.block_until_ready(out)

    ref = transformer3d_ref(x, params, heads=heads, dim_head=dim_head)
    assert out.shape == (B, P, N, D)
    # Tolerance relaxed from 1e-4 to 2e-3 because the softmax normalizer uses the
    # EUP approximate reciprocal (pl.reciprocal(..., approx=True)); all other math
    # (LayerNorm, matmuls, SiLU) is f32 and matches the reference closely.
    assert jnp.allclose(out, ref, rtol=2e-3, atol=2e-3), "mismatch vs reference"

    print("KERNEL_OK")
</pallas_src>

<mosaic_0001>
module attributes {stable_mosaic.version = 11 : i64} {
  func.func @transformer_layer_kernel(%arg0: i32, %arg1: i32, %arg2: memref<4x8x32xf32, #tpu.memory_space<vmem>>, %arg3: memref<1x1x32xf32, #tpu.memory_space<vmem>>, %arg4: memref<1x1x32xf32, #tpu.memory_space<vmem>>, %arg5: memref<1x32x96xf32, #tpu.memory_space<vmem>>, %arg6: memref<1x32x32xf32, #tpu.memory_space<vmem>>, %arg7: memref<1x1x32xf32, #tpu.memory_space<vmem>>, %arg8: memref<1x1x32xf32, #tpu.memory_space<vmem>>, %arg9: memref<1x1x32xf32, #tpu.memory_space<vmem>>, %arg10: memref<1x32x64xf32, #tpu.memory_space<vmem>>, %arg11: memref<1x1x64xf32, #tpu.memory_space<vmem>>, %arg12: memref<1x64x32xf32, #tpu.memory_space<vmem>>, %arg13: memref<1x1x32xf32, #tpu.memory_space<vmem>>, %arg14: memref<4x8x32xf32, #tpu.memory_space<vmem>>) attributes {dimension_semantics = [#tpu.dimension_semantics<parallel>, #tpu.dimension_semantics<arbitrary>], iteration_bounds = array<i64: 2, 2>, scalar_prefetch = 0 : i64, scratch_operands = 0 : i64, tpu.core_type = #tpu.core_type<tc>, window_params = [{transform_indices = @transform_0, window_bounds = array<i64: 4, 8, 32>}, {transform_indices = @transform_1, window_bounds = array<i64: 1, 1, 32>}, {transform_indices = @transform_2, window_bounds = array<i64: 1, 1, 32>}, {transform_indices = @transform_3, window_bounds = array<i64: 1, 32, 96>}, {transform_indices = @transform_4, window_bounds = array<i64: 1, 32, 32>}, {transform_indices = @transform_5, window_bounds = array<i64: 1, 1, 32>}, {transform_indices = @transform_6, window_bounds = array<i64: 1, 1, 32>}, {transform_indices = @transform_7, window_bounds = array<i64: 1, 1, 32>}, {transform_indices = @transform_8, window_bounds = array<i64: 1, 32, 64>}, {transform_indices = @transform_9, window_bounds = array<i64: 1, 1, 64>}, {transform_indices = @transform_10, window_bounds = array<i64: 1, 64, 32>}, {transform_indices = @transform_11, window_bounds = array<i64: 1, 1, 32>}, {transform_indices = @transform_12, window_bounds = array<i64: 4, 8, 32>}]} {
    %c0_i32 = arith.constant 0 : i32
    %0 = arith.cmpi eq, %arg1, %c0_i32 : i32
    %1 = arith.extui %0 : i1 to i32
    %c0_i32_0 = arith.constant 0 : i32
    %2 = arith.cmpi ne, %1, %c0_i32_0 : i32
    scf.if %2 {
      %c0_65 = arith.constant 0 : index
      %c0_66 = arith.constant 0 : index
      %c0_67 = arith.constant 0 : index
      %148 = vector.load %arg2[%c0_65, %c0_66, %c0_67] : memref<4x8x32xf32, #tpu.memory_space<vmem>>, vector<4x8x32xf32>
      %c0_68 = arith.constant 0 : index
      %c0_69 = arith.constant 0 : index
      %c0_70 = arith.constant 0 : index
      %149 = vector.load %arg14[%c0_68, %c0_69, %c0_70] : memref<4x8x32xf32, #tpu.memory_space<vmem>>, vector<4x8x32xf32>
      tpu.vector_store %arg14[%c0_68, %c0_69, %c0_70], %148 {strides = array<i32>} : memref<4x8x32xf32, #tpu.memory_space<vmem>>, vector<4x8x32xf32>,
    } else {
    }
    %c0 = arith.constant 0 : index
    %c0_1 = arith.constant 0 : index
    %c0_2 = arith.constant 0 : index
    %3 = vector.load %arg14[%c0, %c0_1, %c0_2] : memref<4x8x32xf32, #tpu.memory_space<vmem>>, vector<4x8x32xf32>
    %c0_3 = arith.constant 0 : index
    %c0_4 = arith.constant 0 : index
    %c0_5 = arith.constant 0 : index
    %4 = vector.load %arg3[%c0_3, %c0_4, %c0_5] : memref<1x1x32xf32, #tpu.memory_space<vmem>>, vector<1x1x32xf32>
    %5 = vector.shape_cast %4 : vector<1x1x32xf32> to vector<32xf32>
    %c0_6 = arith.constant 0 : index
    %c0_7 = arith.constant 0 : index
    %c0_8 = arith.constant 0 : index
    %6 = vector.load %arg4[%c0_6, %c0_7, %c0_8] : memref<1x1x32xf32, #tpu.memory_space<vmem>>, vector<1x1x32xf32>
    %7 = vector.shape_cast %6 : vector<1x1x32xf32> to vector<32xf32>
    %cst = arith.constant dense<0.000000e+00> : vector<4x8xf32>
    %8 = vector.multi_reduction <add>, %3, %cst [2] : vector<4x8x32xf32> to vector<4x8xf32>
    %9 = vector.shape_cast %8 : vector<4x8xf32> to vector<4x8x1xf32>
    %cst_9 = arith.constant 3.200000e+01 : f32
    %10 = vector.broadcast %cst_9 : f32 to vector<4x8x1xf32>
    %11 = arith.divf %9, %10 : vector<4x8x1xf32>
    %12 = vector.broadcast %11 : vector<4x8x1xf32> to vector<4x8x32xf32>
    %13 = arith.subf %3, %12 : vector<4x8x32xf32>
    %14 = arith.mulf %13, %13 : vector<4x8x32xf32>
    %cst_10 = arith.constant dense<0.000000e+00> : vector<4x8xf32>
    %15 = vector.multi_reduction <add>, %14, %cst_10 [2] : vector<4x8x32xf32> to vector<4x8xf32>
    %16 = vector.shape_cast %15 : vector<4x8xf32> to vector<4x8x1xf32>
    %cst_11 = arith.constant 3.200000e+01 : f32
    %17 = vector.broadcast %cst_11 : f32 to vector<4x8x1xf32>
    %18 = arith.divf %16, %17 : vector<4x8x1xf32>
    %19 = vector.broadcast %11 : vector<4x8x1xf32> to vector<4x8x32xf32>
    %20 = arith.subf %3, %19 : vector<4x8x32xf32>
    %cst_12 = arith.constant 9.99999974E-6 : f32
    %21 = vector.broadcast %cst_12 : f32 to vector<4x8x1xf32>
    %22 = arith.addf %18, %21 : vector<4x8x1xf32>
    %23 = math.rsqrt %22 : vector<4x8x1xf32>
    %24 = vector.broadcast %23 : vector<4x8x1xf32> to vector<4x8x32xf32>
    %25 = arith.mulf %20, %24 : vector<4x8x32xf32>
    %26 = vector.shape_cast %5 : vector<32xf32> to vector<1x1x32xf32>
    %27 = vector.broadcast %26 : vector<1x1x32xf32> to vector<4x8x32xf32>
    %28 = arith.mulf %25, %27 : vector<4x8x32xf32>
    %29 = vector.shape_cast %7 : vector<32xf32> to vector<1x1x32xf32>
    %30 = vector.broadcast %29 : vector<1x1x32xf32> to vector<4x8x32xf32>
    %31 = arith.addf %28, %30 : vector<4x8x32xf32>
    %32 = vector.shape_cast %31 : vector<4x8x32xf32> to vector<32x32xf32>
    %c0_13 = arith.constant 0 : index
    %c0_14 = arith.constant 0 : index
    %c0_15 = arith.constant 0 : index
    %33 = vector.load %arg5[%c0_13, %c0_14, %c0_15] : memref<1x32x96xf32, #tpu.memory_space<vmem>>, vector<1x32x96xf32>
    %34 = vector.shape_cast %33 : vector<1x32x96xf32> to vector<32x96xf32>
    %c0_16 = arith.constant 0 : index
    %c0_17 = arith.constant 0 : index
    %c0_18 = arith.constant 0 : index
    %35 = vector.load %arg6[%c0_16, %c0_17, %c0_18] : memref<1x32x32xf32, #tpu.memory_space<vmem>>, vector<1x32x32xf32>
    %36 = vector.shape_cast %35 : vector<1x32x32xf32> to vector<32x32xf32>
    %cst_19 = arith.constant dense<0.000000e+00> : vector<32x96xf32>
    %37 = tpu.matmul %32, %34, %cst_19 {dimension_numbers = #tpu.dot_dimension_numbers<[1], [0], [0], [1], [0, 0, 1, 1], [], []>} : vector<32x32xf32>, vector<32x96xf32>, vector<32x96xf32> -> vector<32x96xf32>
    %cst_20 = arith.constant 0.000000e+00 : f32
    %38 = vector.broadcast %cst_20 : f32 to vector<32x32xf32>
    %39 = vector.extract_strided_slice %37 {offsets = [0, 0], sizes = [32, 16], strides = [1, 1]} : vector<32x96xf32> to vector<32x16xf32>
    %40 = vector.shape_cast %39 : vector<32x16xf32> to vector<4x8x16xf32>
    %41 = vector.extract_strided_slice %37 {offsets = [0, 32], sizes = [32, 16], strides = [1, 1]} : vector<32x96xf32> to vector<32x16xf32>
    %42 = vector.shape_cast %41 : vector<32x16xf32> to vector<4x8x16xf32>
    %43 = vector.extract_strided_slice %37 {offsets = [0, 64], sizes = [32, 16], strides = [1, 1]} : vector<32x96xf32> to vector<32x16xf32>
    %44 = vector.shape_cast %43 : vector<32x16xf32> to vector<4x8x16xf32>
    "tpu.trace_start"() <{level = 10 : i32, message = "gne,gme->gnm"}> : () -> ()
    %cst_21 = arith.constant dense<0.000000e+00> : vector<4x8x8xf32>
    %45 = tpu.matmul %40, %42, %cst_21 {dimension_numbers = #tpu.dot_dimension_numbers<[2], [2], [1], [1], [0, 0, 0, 1, 1, 1], [0], [0]>} : vector<4x8x16xf32>, vector<4x8x16xf32>, vector<4x8x8xf32> -> vector<4x8x8xf32>
    "tpu.trace_stop"() : () -> ()
    %cst_22 = arith.constant 2.500000e-01 : f32
    %46 = vector.broadcast %cst_22 : f32 to vector<4x8x8xf32>
    %47 = arith.mulf %45, %46 : vector<4x8x8xf32>
    %cst_23 = arith.constant dense<0xFF800000> : vector<4x8xf32>
    %48 = vector.multi_reduction <maximumf>, %47, %cst_23 [2] : vector<4x8x8xf32> to vector<4x8xf32>
    %49 = vector.shape_cast %48 : vector<4x8xf32> to vector<4x8x1xf32>
    %50 = vector.broadcast %49 : vector<4x8x1xf32> to vector<4x8x8xf32>
    %51 = arith.subf %47, %50 : vector<4x8x8xf32>
    %52 = math.exp %51 : vector<4x8x8xf32>
    %cst_24 = arith.constant dense<0.000000e+00> : vector<4x8xf32>
    %53 = vector.multi_reduction <add>, %52, %cst_24 [2] : vector<4x8x8xf32> to vector<4x8xf32>
    %54 = vector.shape_cast %53 : vector<4x8xf32> to vector<4x8x1xf32>
    %55 = tpu.reciprocal %54 {approx = true} : vector<4x8x1xf32> -> vector<4x8x1xf32>
    %56 = vector.broadcast %55 : vector<4x8x1xf32> to vector<4x8x8xf32>
    %57 = arith.mulf %52, %56 : vector<4x8x8xf32>
    "tpu.trace_start"() <{level = 10 : i32, message = "gnm,gme->gne"}> : () -> ()
    %cst_25 = arith.constant dense<0.000000e+00> : vector<4x8x16xf32>
    %58 = tpu.matmul %57, %44, %cst_25 {dimension_numbers = #tpu.dot_dimension_numbers<[2], [1], [1], [2], [0, 0, 0, 1, 1, 2], [0], [0]>} : vector<4x8x8xf32>, vector<4x8x16xf32>, vector<4x8x16xf32> -> vector<4x8x16xf32>
    "tpu.trace_stop"() : () -> ()
    %59 = vector.shape_cast %58 : vector<4x8x16xf32> to vector<32x16xf32>
    %60 = vector.extract_strided_slice %36 {offsets = [0, 0], sizes = [16, 32], strides = [1, 1]} : vector<32x32xf32> to vector<16x32xf32>
    %cst_26 = arith.constant dense<0.000000e+00> : vector<32x32xf32>
    %61 = tpu.matmul %59, %60, %cst_26 {dimension_numbers = #tpu.dot_dimension_numbers<[1], [0], [0], [1], [0, 0, 1, 1], [], []>} : vector<32x16xf32>, vector<16x32xf32>, vector<32x32xf32> -> vector<32x32xf32>
    %62 = arith.addf %38, %61 : vector<32x32xf32>
    %63 = vector.extract_strided_slice %37 {offsets = [0, 16], sizes = [32, 16], strides = [1, 1]} : vector<32x96xf32> to vector<32x16xf32>
    %64 = vector.shape_cast %63 : vector<32x16xf32> to vector<4x8x16xf32>
    %65 = vector.extract_strided_slice %37 {offsets = [0, 48], sizes = [32, 16], strides = [1, 1]} : vector<32x96xf32> to vector<32x16xf32>
    %66 = vector.shape_cast %65 : vector<32x16xf32> to vector<4x8x16xf32>
    %67 = vector.extract_strided_slice %37 {offsets = [0, 80], sizes = [32, 16], strides = [1, 1]} : vector<32x96xf32> to vector<32x16xf32>
    %68 = vector.shape_cast %67 : vector<32x16xf32> to vector<4x8x16xf32>
    "tpu.trace_start"() <{level = 10 : i32, message = "gne,gme->gnm"}> : () -> ()
    %cst_27 = arith.constant dense<0.000000e+00> : vector<4x8x8xf32>
    %69 = tpu.matmul %64, %66, %cst_27 {dimension_numbers = #tpu.dot_dimension_numbers<[2], [2], [1], [1], [0, 0, 0, 1, 1, 1], [0], [0]>} : vector<4x8x16xf32>, vector<4x8x16xf32>, vector<4x8x8xf32> -> vector<4x8x8xf32>
    "tpu.trace_stop"() : () -> ()
    %cst_28 = arith.constant 2.500000e-01 : f32
    %70 = vector.broadcast %cst_28 : f32 to vector<4x8x8xf32>
    %71 = arith.mulf %69, %70 : vector<4x8x8xf32>
    %cst_29 = arith.constant dense<0xFF800000> : vector<4x8xf32>
    %72 = vector.multi_reduction <maximumf>, %71, %cst_29 [2] : vector<4x8x8xf32> to vector<4x8xf32>
    %73 = vector.shape_cast %72 : vector<4x8xf32> to vector<4x8x1xf32>
    %74 = vector.broadcast %73 : vector<4x8x1xf32> to vector<4x8x8xf32>
    %75 = arith.subf %71, %74 : vector<4x8x8xf32>
    %76 = math.exp %75 : vector<4x8x8xf32>
    %cst_30 = arith.constant dense<0.000000e+00> : vector<4x8xf32>
    %77 = vector.multi_reduction <add>, %76, %cst_30 [2] : vector<4x8x8xf32> to vector<4x8xf32>
    %78 = vector.shape_cast %77 : vector<4x8xf32> to vector<4x8x1xf32>
    %79 = tpu.reciprocal %78 {approx = true} : vector<4x8x1xf32> -> vector<4x8x1xf32>
    %80 = vector.broadcast %79 : vector<4x8x1xf32> to vector<4x8x8xf32>
    %81 = arith.mulf %76, %80 : vector<4x8x8xf32>
    "tpu.trace_start"() <{level = 10 : i32, message = "gnm,gme->gne"}> : () -> ()
    %cst_31 = arith.constant dense<0.000000e+00> : vector<4x8x16xf32>
    %82 = tpu.matmul %81, %68, %cst_31 {dimension_numbers = #tpu.dot_dimension_numbers<[2], [1], [1], [2], [0, 0, 0, 1, 1, 2], [0], [0]>} : vector<4x8x8xf32>, vector<4x8x16xf32>, vector<4x8x16xf32> -> vector<4x8x16xf32>
    "tpu.trace_stop"() : () -> ()
    %83 = vector.shape_cast %82 : vector<4x8x16xf32> to vector<32x16xf32>
    %84 = vector.extract_strided_slice %36 {offsets = [16, 0], sizes = [16, 32], strides = [1, 1]} : vector<32x32xf32> to vector<16x32xf32>
    %cst_32 = arith.constant dense<0.000000e+00> : vector<32x32xf32>
    %85 = tpu.matmul %83, %84, %cst_32 {dimension_numbers = #tpu.dot_dimension_numbers<[1], [0], [0], [1], [0, 0, 1, 1], [], []>} : vector<32x16xf32>, vector<16x32xf32>, vector<32x32xf32> -> vector<32x32xf32>
    %86 = arith.addf %62, %85 : vector<32x32xf32>
    %c0_33 = arith.constant 0 : index
    %c0_34 = arith.constant 0 : index
    %c0_35 = arith.constant 0 : index
    %87 = vector.load %arg7[%c0_33, %c0_34, %c0_35] : memref<1x1x32xf32, #tpu.memory_space<vmem>>, vector<1x1x32xf32>
    %88 = vector.shape_cast %87 : vector<1x1x32xf32> to vector<32xf32>
    %89 = vector.shape_cast %88 : vector<32xf32> to vector<1x32xf32>
    %90 = vector.broadcast %89 : vector<1x32xf32> to vector<32x32xf32>
    %91 = arith.addf %86, %90 : vector<32x32xf32>
    %92 = vector.shape_cast %91 : vector<32x32xf32> to vector<4x8x32xf32>
    %93 = arith.addf %3, %92 : vector<4x8x32xf32>
    %c0_36 = arith.constant 0 : index
    %c0_37 = arith.constant 0 : index
    %c0_38 = arith.constant 0 : index
    %94 = vector.load %arg8[%c0_36, %c0_37, %c0_38] : memref<1x1x32xf32, #tpu.memory_space<vmem>>, vector<1x1x32xf32>
    %95 = vector.shape_cast %94 : vector<1x1x32xf32> to vector<32xf32>
    %c0_39 = arith.constant 0 : index
    %c0_40 = arith.constant 0 : index
    %c0_41 = arith.constant 0 : index
    %96 = vector.load %arg9[%c0_39, %c0_40, %c0_41] : memref<1x1x32xf32, #tpu.memory_space<vmem>>, vector<1x1x32xf32>
    %97 = vector.shape_cast %96 : vector<1x1x32xf32> to vector<32xf32>
    %cst_42 = arith.constant dense<0.000000e+00> : vector<4x8xf32>
    %98 = vector.multi_reduction <add>, %93, %cst_42 [2] : vector<4x8x32xf32> to vector<4x8xf32>
    %99 = vector.shape_cast %98 : vector<4x8xf32> to vector<4x8x1xf32>
    %cst_43 = arith.constant 3.200000e+01 : f32
    %100 = vector.broadcast %cst_43 : f32 to vector<4x8x1xf32>
    %101 = arith.divf %99, %100 : vector<4x8x1xf32>
    %102 = vector.broadcast %101 : vector<4x8x1xf32> to vector<4x8x32xf32>
    %103 = arith.subf %93, %102 : vector<4x8x32xf32>
    %104 = arith.mulf %103, %103 : vector<4x8x32xf32>
    %cst_44 = arith.constant dense<0.000000e+00> : vector<4x8xf32>
    %105 = vector.multi_reduction <add>, %104, %cst_44 [2] : vector<4x8x32xf32> to vector<4x8xf32>
    %106 = vector.shape_cast %105 : vector<4x8xf32> to vector<4x8x1xf32>
    %cst_45 = arith.constant 3.200000e+01 : f32
    %107 = vector.broadcast %cst_45 : f32 to vector<4x8x1xf32>
    %108 = arith.divf %106, %107 : vector<4x8x1xf32>
    %109 = vector.broadcast %101 : vector<4x8x1xf32> to vector<4x8x32xf32>
    %110 = arith.subf %93, %109 : vector<4x8x32xf32>
    %cst_46 = arith.constant 9.99999974E-6 : f32
    %111 = vector.broadcast %cst_46 : f32 to vector<4x8x1xf32>
    %112 = arith.addf %108, %111 : vector<4x8x1xf32>
    %113 = math.rsqrt %112 : vector<4x8x1xf32>
    %114 = vector.broadcast %113 : vector<4x8x1xf32> to vector<4x8x32xf32>
    %115 = arith.mulf %110, %114 : vector<4x8x32xf32>
    %116 = vector.shape_cast %95 : vector<32xf32> to vector<1x1x32xf32>
    %117 = vector.broadcast %116 : vector<1x1x32xf32> to vector<4x8x32xf32>
    %118 = arith.mulf %115, %117 : vector<4x8x32xf32>
    %119 = vector.shape_cast %97 : vector<32xf32> to vector<1x1x32xf32>
    %120 = vector.broadcast %119 : vector<1x1x32xf32> to vector<4x8x32xf32>
    %121 = arith.addf %118, %120 : vector<4x8x32xf32>
    %122 = vector.shape_cast %121 : vector<4x8x32xf32> to vector<32x32xf32>
    %c0_47 = arith.constant 0 : index
    %c0_48 = arith.constant 0 : index
    %c0_49 = arith.constant 0 : index
    %123 = vector.load %arg10[%c0_47, %c0_48, %c0_49] : memref<1x32x64xf32, #tpu.memory_space<vmem>>, vector<1x32x64xf32>
    %124 = vector.shape_cast %123 : vector<1x32x64xf32> to vector<32x64xf32>
    %cst_50 = arith.constant dense<0.000000e+00> : vector<32x64xf32>
    %125 = tpu.matmul %122, %124, %cst_50 {dimension_numbers = #tpu.dot_dimension_numbers<[1], [0], [0], [1], [0, 0, 1, 1], [], []>} : vector<32x32xf32>, vector<32x64xf32>, vector<32x64xf32> -> vector<32x64xf32>
    %c0_51 = arith.constant 0 : index
    %c0_52 = arith.constant 0 : index
    %c0_53 = arith.constant 0 : index
    %126 = vector.load %arg11[%c0_51, %c0_52, %c0_53] : memref<1x1x64xf32, #tpu.memory_space<vmem>>, vector<1x1x64xf32>
    %127 = vector.shape_cast %126 : vector<1x1x64xf32> to vector<64xf32>
    %128 = vector.shape_cast %127 : vector<64xf32> to vector<1x64xf32>
    %129 = vector.broadcast %128 : vector<1x64xf32> to vector<32x64xf32>
    %130 = arith.addf %125, %129 : vector<32x64xf32>
    %131 = arith.negf %130 : vector<32x64xf32>
    %132 = math.exp %131 : vector<32x64xf32>
    %cst_54 = arith.constant 1.000000e+00 : f32
    %133 = vector.broadcast %cst_54 : f32 to vector<32x64xf32>
    %134 = arith.addf %133, %132 : vector<32x64xf32>
    %135 = arith.divf %133, %134 : vector<32x64xf32>
    %136 = arith.mulf %130, %135 : vector<32x64xf32>
    %c0_55 = arith.constant 0 : index
    %c0_56 = arith.constant 0 : index
    %c0_57 = arith.constant 0 : index
    %137 = vector.load %arg12[%c0_55, %c0_56, %c0_57] : memref<1x64x32xf32, #tpu.memory_space<vmem>>, vector<1x64x32xf32>
    %138 = vector.shape_cast %137 : vector<1x64x32xf32> to vector<64x32xf32>
    %cst_58 = arith.constant dense<0.000000e+00> : vector<32x32xf32>
    %139 = tpu.matmul %136, %138, %cst_58 {dimension_numbers = #tpu.dot_dimension_numbers<[1], [0], [0], [1], [0, 0, 1, 1], [], []>} : vector<32x64xf32>, vector<64x32xf32>, vector<32x32xf32> -> vector<32x32xf32>
    %c0_59 = arith.constant 0 : index
    %c0_60 = arith.constant 0 : index
    %c0_61 = arith.constant 0 : index
    %140 = vector.load %arg13[%c0_59, %c0_60, %c0_61] : memref<1x1x32xf32, #tpu.memory_space<vmem>>, vector<1x1x32xf32>
    %141 = vector.shape_cast %140 : vector<1x1x32xf32> to vector<32xf32>
    %142 = vector.shape_cast %141 : vector<32xf32> to vector<1x32xf32>
    %143 = vector.broadcast %142 : vector<1x32xf32> to vector<32x32xf32>
    %144 = arith.addf %139, %143 : vector<32x32xf32>
    %145 = vector.shape_cast %144 : vector<32x32xf32> to vector<4x8x32xf32>
    %146 = arith.addf %93, %145 : vector<4x8x32xf32>
    %c0_62 = arith.constant 0 : index
    %c0_63 = arith.constant 0 : index
    %c0_64 = arith.constant 0 : index
    %147 = vector.load %arg14[%c0_62, %c0_63, %c0_64] : memref<4x8x32xf32, #tpu.memory_space<vmem>>, vector<4x8x32xf32>
    tpu.vector_store %arg14[%c0_62, %c0_63, %c0_64], %146 {strides = array<i32>} : memref<4x8x32xf32, #tpu.memory_space<vmem>>, vector<4x8x32xf32>,
    return
  }
  func.func @transform_0(%arg0: i32, %arg1: i32) -> (i32, i32, i32) {
    %c0_i32 = arith.constant 0 : i32
    %c0_i32_0 = arith.constant 0 : i32
    %c0_i32_1 = arith.constant 0 : i32
    return %arg0, %c0_i32, %c0_i32_0 : i32, i32, i32
  }
  func.func @transform_1(%arg0: i32, %arg1: i32) -> (i32, i32, i32) {
    %c0_i32 = arith.constant 0 : i32
    %c0_i32_0 = arith.constant 0 : i32
    %c0_i32_1 = arith.constant 0 : i32
    return %arg1, %c0_i32, %c0_i32_0 : i32, i32, i32
  }
  func.func @transform_2(%arg0: i32, %arg1: i32) -> (i32, i32, i32) {
    %c0_i32 = arith.constant 0 : i32
    %c0_i32_0 = arith.constant 0 : i32
    %c0_i32_1 = arith.constant 0 : i32
    return %arg1, %c0_i32, %c0_i32_0 : i32, i32, i32
  }
  func.func @transform_3(%arg0: i32, %arg1: i32) -> (i32, i32, i32) {
    %c0_i32 = arith.constant 0 : i32
    %c0_i32_0 = arith.constant 0 : i32
    %c0_i32_1 = arith.constant 0 : i32
    return %arg1, %c0_i32, %c0_i32_0 : i32, i32, i32
  }
  func.func @transform_4(%arg0: i32, %arg1: i32) -> (i32, i32, i32) {
    %c0_i32 = arith.constant 0 : i32
    %c0_i32_0 = arith.constant 0 : i32
    %c0_i32_1 = arith.constant 0 : i32
    return %arg1, %c0_i32, %c0_i32_0 : i32, i32, i32
  }
  func.func @transform_5(%arg0: i32, %arg1: i32) -> (i32, i32, i32) {
    %c0_i32 = arith.constant 0 : i32
    %c0_i32_0 = arith.constant 0 : i32
    %c0_i32_1 = arith.constant 0 : i32
    return %arg1, %c0_i32, %c0_i32_0 : i32, i32, i32
  }
  func.func @transform_6(%arg0: i32, %arg1: i32) -> (i32, i32, i32) {
    %c0_i32 = arith.constant 0 : i32
    %c0_i32_0 = arith.constant 0 : i32
    %c0_i32_1 = arith.constant 0 : i32
    return %arg1, %c0_i32, %c0_i32_0 : i32, i32, i32
  }
  func.func @transform_7(%arg0: i32, %arg1: i32) -> (i32, i32, i32) {
    %c0_i32 = arith.constant 0 : i32
    %c0_i32_0 = arith.constant 0 : i32
    %c0_i32_1 = arith.constant 0 : i32
    return %arg1, %c0_i32, %c0_i32_0 : i32, i32, i32
  }
  func.func @transform_8(%arg0: i32, %arg1: i32) -> (i32, i32, i32) {
    %c0_i32 = arith.constant 0 : i32
    %c0_i32_0 = arith.constant 0 : i32
    %c0_i32_1 = arith.constant 0 : i32
    return %arg1, %c0_i32, %c0_i32_0 : i32, i32, i32
  }
  func.func @transform_9(%arg0: i32, %arg1: i32) -> (i32, i32, i32) {
    %c0_i32 = arith.constant 0 : i32
    %c0_i32_0 = arith.constant 0 : i32
    %c0_i32_1 = arith.constant 0 : i32
    return %arg1, %c0_i32, %c0_i32_0 : i32, i32, i32
  }
  func.func @transform_10(%arg0: i32, %arg1: i32) -> (i32, i32, i32) {
    %c0_i32 = arith.constant 0 : i32
    %c0_i32_0 = arith.constant 0 : i32
    %c0_i32_1 = arith.constant 0 : i32
    return %arg1, %c0_i32, %c0_i32_0 : i32, i32, i32
  }
  func.func @transform_11(%arg0: i32, %arg1: i32) -> (i32, i32, i32) {
    %c0_i32 = arith.constant 0 : i32
    %c0_i32_0 = arith.constant 0 : i32
    %c0_i32_1 = arith.constant 0 : i32
    return %arg1, %c0_i32, %c0_i32_0 : i32, i32, i32
  }
  func.func @transform_12(%arg0: i32, %arg1: i32) -> (i32, i32, i32) {
    %c0_i32 = arith.constant 0 : i32
    %c0_i32_0 = arith.constant 0 : i32
    %c0_i32_1 = arith.constant 0 : i32
    return %arg0, %c0_i32, %c0_i32_0 : i32, i32, i32
  }
}

</mosaic_0001>

<llo_original>
// kernel: tpu_custom_call.1
$region0: #{tpu_custom_call.1}
  #allocation0 [shape = 'u32[]', space=smem, size = 0x4, offset = 0x4, fixed_abs, tag = 'smem constant byte address 0x4 - core index']
  #allocation1 [shape = 'u32[144,128]{1,0:T(1,128)}', space=vmem, size = 0x12000, scoped, tag = 'internal scratch']
  %s0 = inlined_call_operand.vmem [shape: f32[8,8,32], index: 0, kind: input, shape index: {}]
  %s1 = inlined_call_operand.vmem [shape: f32[2,1,32], index: 1, kind: input, shape index: {}]
  %s2 = inlined_call_operand.vmem [shape: f32[2,1,32], index: 2, kind: input, shape index: {}]
  %s3 = inlined_call_operand.vmem [shape: f32[2,32,96], index: 3, kind: input, shape index: {}]
  %s4 = inlined_call_operand.vmem [shape: f32[2,32,32], index: 4, kind: input, shape index: {}]
  %s5 = inlined_call_operand.vmem [shape: f32[2,1,32], index: 5, kind: input, shape index: {}]
  %s6 = inlined_call_operand.vmem [shape: f32[2,1,32], index: 6, kind: input, shape index: {}]
  %s7 = inlined_call_operand.vmem [shape: f32[2,1,32], index: 7, kind: input, shape index: {}]
  %s8 = inlined_call_operand.hbm [shape: f32[2,32,64], index: 8, kind: input, shape index: {}]
  %s9 = inlined_call_operand.vmem [shape: f32[2,1,64], index: 9, kind: input, shape index: {}]
  %s10 = inlined_call_operand.vmem [shape: f32[2,64,32], index: 10, kind: input, shape index: {}]
  %s11 = inlined_call_operand.vmem [shape: f32[2,1,32], index: 11, kind: input, shape index: {}]
  %s12 = inlined_call_operand.hbm [shape: f32[8,8,32], index: 12, kind: output, shape index: {}]
  %s13 = sld [smem:[#allocation0]]
  $region89: #{tpu_custom_call.1} parent=0
    _
  %s15 = ssub.s32 1, %s13
  %s16 = scalar_select 0, %s15, %s13
  $region1: #{tpu_custom_call.1} parent=0
    #allocation2 [shape = 'u8[32768]{0}', space=vmem, size = 0x8000, scoped, tag = 'input window, operand 8']
    #allocation3 [shape = 's32[2]{0}', space=sflag, size = 0x8, scoped, tag = 'scoped memory for tpu_custom_call.1']
    #allocation4 [shape = 's32[2]{0}', space=sflag, size = 0x8, scoped, tag = 'scoped memory for tpu_custom_call.1']
    #allocation5 [shape = 'u8[32768]{0}', space=vmem, size = 0x8000, scoped, tag = 'output window, operand 0']
    %17 = vsyncpa [#allocation3], 0
    %s18 = scalar_lea.sflag [#allocation3], 1
    %19 = vsyncpa %s18, 0
    %20 = vsyncpa [#allocation4], 0
    %s21 = scalar_lea.sflag [#allocation4], 1
    %22 = vsyncpa %s21, 0
    loop: start=0, step=1, limit=6
    $region2: #{tpu_custom_call.1} parent=1 // loop_pre_header
      _
    $region3: #{tpu_custom_call.1} parent=1 // loop_header
      %s24 = sphi 0, %s28
      %p25 = scmp.ge.s32.totalorder %s24, 6
      %s31 = sphi 0, %s43
      %s32 = sphi 0, %s39
      %s33 = sphi 0, %s31
      %s34 = sphi 0, %s32
      %s35 = sphi 0, %s33
      %s36 = sphi 0, %s34
      %s46 = sphi 0, %s48
      %s49 = sphi 0, %s46
      %s50 = sphi 0, %s49
      %s66 = sphi 0, %s50
      %s72 = sphi 0, %s74
      %s75 = sphi 0, %s72
      %s76 = sphi 0, %s75
      %s92 = sphi 0, %s76
      %s98 = sphi 0, %s100
      %s101 = sphi 0, %s98
      %s102 = sphi 0, %s101
      %s118 = sphi 0, %s102
      %s124 = sphi 0, %s126
      %s127 = sphi 0, %s124
      %s128 = sphi 0, %s127
      %s144 = sphi 0, %s128
      %s150 = sphi 0, %s152
      %s153 = sphi 0, %s150
      %s154 = sphi 0, %s153
      %s170 = sphi 0, %s154
      %s176 = sphi 0, %s178
      %s179 = sphi 0, %s176
      %s180 = sphi 0, %s179
      %s196 = sphi 0, %s180
      %s202 = sphi 0, %s204
      %s205 = sphi 0, %s202
      %s206 = sphi 0, %s205
      %s222 = sphi 0, %s206
      %s228 = sphi 0, %s230
      %s231 = sphi 0, %s228
      %s232 = sphi 0, %s231
      %s248 = sphi 0, %s232
      %s254 = sphi 0, %s256
      %s257 = sphi 0, %s254
      %s258 = sphi 0, %s257
      %s274 = sphi 0, %s258
      %s280 = sphi 0, %s282
      %s283 = sphi 0, %s280
      %s284 = sphi 0, %s283
      %s300 = sphi 0, %s284
      %s306 = sphi 0, %s308
      %s309 = sphi 0, %s306
      %s310 = sphi 0, %s309
      %s326 = sphi 0, %s310
      %s332 = sphi 0, %s334
      %s335 = sphi 0, %s332
      %s336 = sphi 0, %s335
      %s352 = sphi 0, %s336
      %s358 = sphi 0, %s360
      %s361 = sphi 0, %s358
      %s362 = sphi 0, %s361
      %s378 = sphi 0, %s362
    $region4: #{tpu_custom_call.1} parent=1 // loop_header_branch
      %27 = sbr.rel (%p25) target = $region8
    $region5: #{tpu_custom_call.1} parent=1 // loop_body
      %s29 = ssub.s32 %s24, 1
      %s30 = ssub.s32 %s24, 2
      %s37 = sadd.s32 1, %s32
      %p38 = scmp.ge.s32.totalorder %s37, 2
      %s39 = scalar_select %p38, 0, %s37
      %s40 = sadd.s32 1, %s31
      %s41 = scalar_select %p38, %s40, %s31
      %p42 = scmp.ge.s32.totalorder %s41, 2
      %s43 = scalar_select %p42, 0, %s41
      %s44 = ssub.s32 %s31, %s43
      %p45 = scmp.eq.s32.totalorder %s44, 0
      %s47 = sadd.s32 %s46, 1
      %s48 = scalar_select %p45, %s46, %s47
      %p51 = pneg %p45
      %p52 = scmp.eq.s32.totalorder %s24, 3
      %p53 = por %p51, %p52
      %p54 = scmp.ne.s32.totalorder %s46, %s49
      %p55 = scmp.eq.s32.totalorder %s24, 0
      %p56 = por %p54, %p55
      %p57 = scmp.ne.s32.totalorder %s46, %s49
      %p58 = scmp.eq.s32.totalorder %s29, 3
      %p59 = por %p57, %p58
      %p60 = scmp.ne.s32.totalorder %s49, %s50
      %p61 = scmp.eq.s32.totalorder %s29, 0
      %p62 = por %p60, %p61
      %p63 = scmp.ne.s32.totalorder %s49, %s50
      %p64 = scmp.eq.s32.totalorder %s30, 3
      %p65 = por %p63, %p64
      %p67 = scmp.ne.s32.totalorder %s50, %s66
      %p68 = scmp.eq.s32.totalorder %s30, 0
      %p69 = por %p67, %p68
      %s70 = ssub.s32 %s32, %s39
      %p71 = scmp.eq.s32.totalorder %s70, 0
      %s73 = sadd.s32 %s72, 1
      %s74 = scalar_select %p71, %s72, %s73
      %p77 = pneg %p71
      %p78 = scmp.eq.s32.totalorder %s24, 3
      %p79 = por %p77, %p78
      %p80 = scmp.ne.s32.totalorder %s72, %s75
      %p81 = scmp.eq.s32.totalorder %s24, 0
      %p82 = por %p80, %p81
      %p83 = scmp.ne.s32.totalorder %s72, %s75
      %p84 = scmp.eq.s32.totalorder %s29, 3
      %p85 = por %p83, %p84
      %p86 = scmp.ne.s32.totalorder %s75, %s76
      %p87 = scmp.eq.s32.totalorder %s29, 0
      %p88 = por %p86, %p87
      %p89 = scmp.ne.s32.totalorder %s75, %s76
      %p90 = scmp.eq.s32.totalorder %s30, 3
      %p91 = por %p89, %p90
      %p93 = scmp.ne.s32.totalorder %s76, %s92
      %p94 = scmp.eq.s32.totalorder %s30, 0
      %p95 = por %p93, %p94
      %s96 = ssub.s32 %s32, %s39
      %p97 = scmp.eq.s32.totalorder %s96, 0
      %s99 = sadd.s32 %s98, 1
      %s100 = scalar_select %p97, %s98, %s99
      %p103 = pneg %p97
      %p104 = scmp.eq.s32.totalorder %s24, 3
      %p105 = por %p103, %p104
      %p106 = scmp.ne.s32.totalorder %s98, %s101
      %p107 = scmp.eq.s32.totalorder %s24, 0
      %p108 = por %p106, %p107
      %p109 = scmp.ne.s32.totalorder %s98, %s101
      %p110 = scmp.eq.s32.totalorder %s29, 3
      %p111 = por %p109, %p110
      %p112 = scmp.ne.s32.totalorder %s101, %s102
      %p113 = scmp.eq.s32.totalorder %s29, 0
      %p114 = por %p112, %p113
      %p115 = scmp.ne.s32.totalorder %s101, %s102
      %p116 = scmp.eq.s32.totalorder %s30, 3
      %p117 = por %p115, %p116
      %p119 = scmp.ne.s32.totalorder %s102, %s118
      %p120 = scmp.eq.s32.totalorder %s30, 0
      %p121 = por %p119, %p120
      %s122 = ssub.s32 %s32, %s39
      %p123 = scmp.eq.s32.totalorder %s122, 0
      %s125 = sadd.s32 %s124, 1
      %s126 = scalar_select %p123, %s124, %s125
      %p129 = pneg %p123
      %p130 = scmp.eq.s32.totalorder %s24, 3
      %p131 = por %p129, %p130
      %p132 = scmp.ne.s32.totalorder %s124, %s127
      %p133 = scmp.eq.s32.totalorder %s24, 0
      %p134 = por %p132, %p133
      %p135 = scmp.ne.s32.totalorder %s124, %s127
      %p136 = scmp.eq.s32.totalorder %s29, 3
      %p137 = por %p135, %p136
      %p138 = scmp.ne.s32.totalorder %s127, %s128
      %p139 = scmp.eq.s32.totalorder %s29, 0
      %p140 = por %p138, %p139
      %p141 = scmp.ne.s32.totalorder %s127, %s128
      %p142 = scmp.eq.s32.totalorder %s30, 3
      %p143 = por %p141, %p142
      %p145 = scmp.ne.s32.totalorder %s128, %s144
      %p146 = scmp.eq.s32.totalorder %s30, 0
      %p147 = por %p145, %p146
      %s148 = ssub.s32 %s32, %s39
      %p149 = scmp.eq.s32.totalorder %s148, 0
      %s151 = sadd.s32 %s150, 1
      %s152 = scalar_select %p149, %s150, %s151
      %p155 = pneg %p149
      %p156 = scmp.eq.s32.totalorder %s24, 3
      %p157 = por %p155, %p156
      %p158 = scmp.ne.s32.totalorder %s150, %s153
      %p159 = scmp.eq.s32.totalorder %s24, 0
      %p160 = por %p158, %p159
      %p161 = scmp.ne.s32.totalorder %s150, %s153
      %p162 = scmp.eq.s32.totalorder %s29, 3
      %p163 = por %p161, %p162
      %p164 = scmp.ne.s32.totalorder %s153, %s154
      %p165 = scmp.eq.s32.totalorder %s29, 0
      %p166 = por %p164, %p165
      %p167 = scmp.ne.s32.totalorder %s153, %s154
      %p168 = scmp.eq.s32.totalorder %s30, 3
      %p169 = por %p167, %p168
      %p171 = scmp.ne.s32.totalorder %s154, %s170
      %p172 = scmp.eq.s32.totalorder %s30, 0
      %p173 = por %p171, %p172
      %s174 = ssub.s32 %s32, %s39
      %p175 = scmp.eq.s32.totalorder %s174, 0
      %s177 = sadd.s32 %s176, 1
      %s178 = scalar_select %p175, %s176, %s177
      %p181 = pneg %p175
      %p182 = scmp.eq.s32.totalorder %s24, 3
      %p183 = por %p181, %p182
      %p184 = scmp.ne.s32.totalorder %s176, %s179
      %p185 = scmp.eq.s32.totalorder %s24, 0
      %p186 = por %p184, %p185
      %p187 = scmp.ne.s32.totalorder %s176, %s179
      %p188 = scmp.eq.s32.totalorder %s29, 3
      %p189 = por %p187, %p188
      %p190 = scmp.ne.s32.totalorder %s179, %s180
      %p191 = scmp.eq.s32.totalorder %s29, 0
      %p192 = por %p190, %p191
      %p193 = scmp.ne.s32.totalorder %s179, %s180
      %p194 = scmp.eq.s32.totalorder %s30, 3
      %p195 = por %p193, %p194
      %p197 = scmp.ne.s32.totalorder %s180, %s196
      %p198 = scmp.eq.s32.totalorder %s30, 0
      %p199 = por %p197, %p198
      %s200 = ssub.s32 %s32, %s39
      %p201 = scmp.eq.s32.totalorder %s200, 0
      %s203 = sadd.s32 %s202, 1
      %s204 = scalar_select %p201, %s202, %s203
      %p207 = pneg %p201
      %p208 = scmp.eq.s32.totalorder %s24, 3
      %p209 = por %p207, %p208
      %p210 = scmp.ne.s32.totalorder %s202, %s205
      %p211 = scmp.eq.s32.totalorder %s24, 0
      %p212 = por %p210, %p211
      %p213 = scmp.ne.s32.totalorder %s202, %s205
      %p214 = scmp.eq.s32.totalorder %s29, 3
      %p215 = por %p213, %p214
      %p216 = scmp.ne.s32.totalorder %s205, %s206
      %p217 = scmp.eq.s32.totalorder %s29, 0
      %p218 = por %p216, %p217
      %p219 = scmp.ne.s32.totalorder %s205, %s206
      %p220 = scmp.eq.s32.totalorder %s30, 3
      %p221 = por %p219, %p220
      %p223 = scmp.ne.s32.totalorder %s206, %s222
      %p224 = scmp.eq.s32.totalorder %s30, 0
      %p225 = por %p223, %p224
      %s226 = ssub.s32 %s32, %s39
      %p227 = scmp.eq.s32.totalorder %s226, 0
      %s229 = sadd.s32 %s228, 1
      %s230 = scalar_select %p227, %s228, %s229
      %p233 = pneg %p227
      %p234 = scmp.eq.s32.totalorder %s24, 3
      %p235 = por %p233, %p234
      %p236 = scmp.ne.s32.totalorder %s228, %s231
      %p237 = scmp.eq.s32.totalorder %s24, 0
      %p238 = por %p236, %p237
      %p239 = scmp.ne.s32.totalorder %s228, %s231
      %p240 = scmp.eq.s32.totalorder %s29, 3
      %p241 = por %p239, %p240
      %p242 = scmp.ne.s32.totalorder %s231, %s232
      %p243 = scmp.eq.s32.totalorder %s29, 0
      %p244 = por %p242, %p243
      %p245 = scmp.ne.s32.totalorder %s231, %s232
      %p246 = scmp.eq.s32.totalorder %s30, 3
      %p247 = por %p245, %p246
      %p249 = scmp.ne.s32.totalorder %s232, %s248
      %p250 = scmp.eq.s32.totalorder %s30, 0
      %p251 = por %p249, %p250
      %s252 = ssub.s32 %s32, %s39
      %p253 = scmp.eq.s32.totalorder %s252, 0
      %s255 = sadd.s32 %s254, 1
      %s256 = scalar_select %p253, %s254, %s255
      %p259 = pneg %p253
      %p260 = scmp.eq.s32.totalorder %s24, 3
      %p261 = por %p259, %p260
      %p262 = scmp.ne.s32.totalorder %s254, %s257
      %p263 = scmp.eq.s32.totalorder %s24, 0
      %p264 = por %p262, %p263
      %p265 = scmp.ne.s32.totalorder %s254, %s257
      %p266 = scmp.eq.s32.totalorder %s29, 3
      %p267 = por %p265, %p266
      %p268 = scmp.ne.s32.totalorder %s257, %s258
      %p269 = scmp.eq.s32.totalorder %s29, 0
      %p270 = por %p268, %p269
      %p271 = scmp.ne.s32.totalorder %s257, %s258
      %p272 = scmp.eq.s32.totalorder %s30, 3
      %p273 = por %p271, %p272
      %p275 = scmp.ne.s32.totalorder %s258, %s274
      %p276 = scmp.eq.s32.totalorder %s30, 0
      %p277 = por %p275, %p276
      %s278 = ssub.s32 %s32, %s39
      %p279 = scmp.eq.s32.totalorder %s278, 0
      %s281 = sadd.s32 %s280, 1
      %s282 = scalar_select %p279, %s280, %s281
      %p285 = pneg %p279
      %p286 = scmp.eq.s32.totalorder %s24, 3
      %p287 = por %p285, %p286
      %p288 = scmp.ne.s32.totalorder %s280, %s283
      %p289 = scmp.eq.s32.totalorder %s24, 0
      %p290 = por %p288, %p289
      %p291 = scmp.ne.s32.totalorder %s280, %s283
      %p292 = scmp.eq.s32.totalorder %s29, 3
      %p293 = por %p291, %p292
      %p294 = scmp.ne.s32.totalorder %s283, %s284
      %p295 = scmp.eq.s32.totalorder %s29, 0
      %p296 = por %p294, %p295
      %p297 = scmp.ne.s32.totalorder %s283, %s284
      %p298 = scmp.eq.s32.totalorder %s30, 3
      %p299 = por %p297, %p298
      %p301 = scmp.ne.s32.totalorder %s284, %s300
      %p302 = scmp.eq.s32.totalorder %s30, 0
      %p303 = por %p301, %p302
      %s304 = ssub.s32 %s32, %s39
      %p305 = scmp.eq.s32.totalorder %s304, 0
      %s307 = sadd.s32 %s306, 1
      %s308 = scalar_select %p305, %s306, %s307
      %p311 = pneg %p305
      %p312 = scmp.eq.s32.totalorder %s24, 3
      %p313 = por %p311, %p312
      %p314 = scmp.ne.s32.totalorder %s306, %s309
      %p315 = scmp.eq.s32.totalorder %s24, 0
      %p316 = por %p314, %p315
      %p317 = scmp.ne.s32.totalorder %s306, %s309
      %p318 = scmp.eq.s32.totalorder %s29, 3
      %p319 = por %p317, %p318
      %p320 = scmp.ne.s32.totalorder %s309, %s310
      %p321 = scmp.eq.s32.totalorder %s29, 0
      %p322 = por %p320, %p321
      %p323 = scmp.ne.s32.totalorder %s309, %s310
      %p324 = scmp.eq.s32.totalorder %s30, 3
      %p325 = por %p323, %p324
      %p327 = scmp.ne.s32.totalorder %s310, %s326
      %p328 = scmp.eq.s32.totalorder %s30, 0
      %p329 = por %p327, %p328
      %s330 = ssub.s32 %s32, %s39
      %p331 = scmp.eq.s32.totalorder %s330, 0
      %s333 = sadd.s32 %s332, 1
      %s334 = scalar_select %p331, %s332, %s333
      %p337 = pneg %p331
      %p338 = scmp.eq.s32.totalorder %s24, 3
      %p339 = por %p337, %p338
      %p340 = scmp.ne.s32.totalorder %s332, %s335
      %p341 = scmp.eq.s32.totalorder %s24, 0
      %p342 = por %p340, %p341
      %p343 = scmp.ne.s32.totalorder %s332, %s335
      %p344 = scmp.eq.s32.totalorder %s29, 3
      %p345 = por %p343, %p344
      %p346 = scmp.ne.s32.totalorder %s335, %s336
      %p347 = scmp.eq.s32.totalorder %s29, 0
      %p348 = por %p346, %p347
      %p349 = scmp.ne.s32.totalorder %s335, %s336
      %p350 = scmp.eq.s32.totalorder %s30, 3
      %p351 = por %p349, %p350
      %p353 = scmp.ne.s32.totalorder %s336, %s352
      %p354 = scmp.eq.s32.totalorder %s30, 0
      %p355 = por %p353, %p354
      %s356 = ssub.s32 %s31, %s43
      %p357 = scmp.eq.s32.totalorder %s356, 0
      %s359 = sadd.s32 %s358, 1
      %s360 = scalar_select %p357, %s358, %s359
      %p363 = pneg %p357
      %p364 = scmp.eq.s32.totalorder %s24, 3
      %p365 = por %p363, %p364
      %p366 = scmp.ne.s32.totalorder %s358, %s361
      %p367 = scmp.eq.s32.totalorder %s24, 0
      %p368 = por %p366, %p367
      %p369 = scmp.ne.s32.totalorder %s358, %s361
      %p370 = scmp.eq.s32.totalorder %s29, 3
      %p371 = por %p369, %p370
      %p372 = scmp.ne.s32.totalorder %s361, %s362
      %p373 = scmp.eq.s32.totalorder %s29, 0
      %p374 = por %p372, %p373
      %p375 = scmp.ne.s32.totalorder %s361, %s362
      %p376 = scmp.eq.s32.totalorder %s30, 3
      %p377 = por %p375, %p376
      %p379 = scmp.ne.s32.totalorder %s362, %s378
      %p380 = scmp.eq.s32.totalorder %s30, 0
      %p381 = por %p379, %p380
      %p382 = scmp.le.s32.totalorder 1, %s24
      %p383 = scmp.lt.s32.totalorder %s24, 5
      %p384 = pnand %p382, %p383
      %p385 = pneg %p384
      // Predicated region
      $region9: #{tpu_custom_call.1} parent=5 // pred_check
        _
      $region10: #{tpu_custom_call.1} parent=5 // pred_check_branch
        %387 = sbr.rel (%p384) target = $region12
      $region11: #{tpu_custom_call.1} parent=5 // pred_region
        %s388 = ssub.s32 %s24, 1
      $region12: #{tpu_custom_call.1} parent=5 // pred_fallthru
        _
      %p389 = scmp.lt.s32.totalorder %s24, 4
      // Predicated region
      $region13: #{tpu_custom_call.1} parent=5 // pred_check
        %p390 = pneg %p389
      $region14: #{tpu_custom_call.1} parent=5 // pred_check_branch
        %392 = sbr.rel (%p390) target = $region16
      $region15: #{tpu_custom_call.1} parent=5 // pred_region
        // Predicated region
        $region17: #{tpu_custom_call.1} parent=15 // pred_check
          %p393 = pneg %p56
        $region18: #{tpu_custom_call.1} parent=15 // pred_check_branch
          %395 = sbr.rel (%p393) target = $region20
        $region19: #{tpu_custom_call.1} parent=15 // pred_region
          %s396 = smul.u32 4, %s31
          %p397 = scmp.lt.s32.totalorder %s396, 7
          %s398 = scalar_select %p397, %s396, 7
          %s399 = smul.addr %s398, 8
          %s400 = scalar_lea.vmem %s0, %s399
          %s401 = smul.u32 4, %s31
        $region20: #{tpu_custom_call.1} parent=15 // pred_fallthru
          _
        // Predicated region
        $region21: #{tpu_custom_call.1} parent=15 // pred_check
          %p402 = pneg %p82
        $region22: #{tpu_custom_call.1} parent=15 // pred_check_branch
          %404 = sbr.rel (%p402) target = $region24
        $region23: #{tpu_custom_call.1} parent=15 // pred_region
          %p405 = scmp.lt.s32.totalorder %s32, 1
          %s406 = scalar_select %p405, %s32, 1
          %s407 = scalar_lea.vmem %s1, %s406
        $region24: #{tpu_custom_call.1} parent=15 // pred_fallthru
          _
        // Predicated region
        $region25: #{tpu_custom_call.1} parent=15 // pred_check
          %p408 = pneg %p108
        $region26: #{tpu_custom_call.1} parent=15 // pred_check_branch
          %410 = sbr.rel (%p408) target = $region28
        $region27: #{tpu_custom_call.1} parent=15 // pred_region
          %p411 = scmp.lt.s32.totalorder %s32, 1
          %s412 = scalar_select %p411, %s32, 1
          %s413 = scalar_lea.vmem %s2, %s412
        $region28: #{tpu_custom_call.1} parent=15 // pred_fallthru
          _
        // Predicated region
        $region29: #{tpu_custom_call.1} parent=15 // pred_check
          %p414 = pneg %p134
        $region30: #{tpu_custom_call.1} parent=15 // pred_check_branch
          %416 = sbr.rel (%p414) target = $region32
        $region31: #{tpu_custom_call.1} parent=15 // pred_region
          %p417 = scmp.lt.s32.totalorder %s32, 1
          %s418 = scalar_select %p417, %s32, 1
          %s419 = smul.addr %s418, 4
          %s420 = smul.addr %s419, 8
          %s421 = scalar_lea.vmem %s3, %s420
        $region32: #{tpu_custom_call.1} parent=15 // pred_fallthru
          _
        // Predicated region
        $region33: #{tpu_custom_call.1} parent=15 // pred_check
          %p422 = pneg %p160
        $region34: #{tpu_custom_call.1} parent=15 // pred_check_branch
          %424 = sbr.rel (%p422) target = $region36
        $region35: #{tpu_custom_call.1} parent=15 // pred_region
          %p425 = scmp.lt.s32.totalorder %s32, 1
          %s426 = scalar_select %p425, %s32, 1
          %s427 = smul.addr %s426, 4
          %s428 = smul.addr %s427, 8
          %s429 = scalar_lea.vmem %s4, %s428
        $region36: #{tpu_custom_call.1} parent=15 // pred_fallthru
          _
        // Predicated region
        $region37: #{tpu_custom_call.1} parent=15 // pred_check
          %p430 = pneg %p186
        $region38: #{tpu_custom_call.1} parent=15 // pred_check_branch
          %432 = sbr.rel (%p430) target = $region40
        $region39: #{tpu_custom_call.1} parent=15 // pred_region
          %p433 = scmp.lt.s32.totalorder %s32, 1
          %s434 = scalar_select %p433, %s32, 1
          %s435 = scalar_lea.vmem %s5, %s434
        $region40: #{tpu_custom_call.1} parent=15 // pred_fallthru
          _
        // Predicated region
        $region41: #{tpu_custom_call.1} parent=15 // pred_check
          %p436 = pneg %p212
        $region42: #{tpu_custom_call.1} parent=15 // pred_check_branch
          %438 = sbr.rel (%p436) target = $region44
        $region43: #{tpu_custom_call.1} parent=15 // pred_region
          %p439 = scmp.lt.s32.totalorder %s32, 1
          %s440 = scalar_select %p439, %s32, 1
          %s441 = scalar_lea.vmem %s6, %s440
        $region44: #{tpu_custom_call.1} parent=15 // pred_fallthru
          _
        // Predicated region
        $region45: #{tpu_custom_call.1} parent=15 // pred_check
          %p442 = pneg %p238
        $region46: #{tpu_custom_call.1} parent=15 // pred_check_branch
          %444 = sbr.rel (%p442) target = $region48
        $region47: #{tpu_custom_call.1} parent=15 // pred_region
          %p445 = scmp.lt.s32.totalorder %s32, 1
          %s446 = scalar_select %p445, %s32, 1
          %s447 = scalar_lea.vmem %s7, %s446
        $region48: #{tpu_custom_call.1} parent=15 // pred_fallthru
          _
        // Predicated region
        $region49: #{tpu_custom_call.1} parent=15 // pred_check
          %p448 = pneg %p264
        $region50: #{tpu_custom_call.1} parent=15 // pred_check_branch
          %450 = sbr.rel (%p448) target = $region52
        $region51: #{tpu_custom_call.1} parent=15 // pred_region
          %s451 = sand.u32 %s254, 1
          %s452 = scalar_lea.sflag [#allocation3], %s451
          %s453 = sand.u32 %s254, 1
          %s454 = smul.addr %s453, 32
          %s455 = scalar_lea.vmem [#allocation2], %s454
          %s457 = ssub.s32 512, 512
          %458 = vsyncadd %s452, %s457
          %s459 = smul.addr %s32, 4
          %s460 = smul.addr %s459, 128
          %s461 = scalar_lea.hbm %s8, %s460
          %s462 = sshll.u32 %s455, 4
          %s463 = int_to_ptr.vmem [resolvable:$true] %s462
          %468 = dma.hbm_to_vmem [thread:$0]  %s461, 512, %s463, %s452, 128, 128, 8
        $region52: #{tpu_custom_call.1} parent=15 // pred_fallthru
          _
        // Predicated region
        $region53: #{tpu_custom_call.1} parent=15 // pred_check
          %p469 = pneg %p290
        $region54: #{tpu_custom_call.1} parent=15 // pred_check_branch
          %471 = sbr.rel (%p469) target = $region56
        $region55: #{tpu_custom_call.1} parent=15 // pred_region
          %p472 = scmp.lt.s32.totalorder %s32, 1
          %s473 = scalar_select %p472, %s32, 1
          %s474 = scalar_lea.vmem %s9, %s473
        $region56: #{tpu_custom_call.1} parent=15 // pred_fallthru
          _
        // Predicated region
        $region57: #{tpu_custom_call.1} parent=15 // pred_check
          %p475 = pneg %p316
        $region58: #{tpu_custom_call.1} parent=15 // pred_check_branch
          %477 = sbr.rel (%p475) target = $region60
        $region59: #{tpu_custom_call.1} parent=15 // pred_region
          %p478 = scmp.lt.s32.totalorder %s32, 1
          %s479 = scalar_select %p478, %s32, 1
          %s480 = smul.addr %s479, 8
          %s481 = smul.addr %s480, 8
          %s482 = scalar_lea.vmem %s10, %s481
        $region60: #{tpu_custom_call.1} parent=15 // pred_fallthru
          _
        // Predicated region
        $region61: #{tpu_custom_call.1} parent=15 // pred_check
          %p483 = pneg %p342
        $region62: #{tpu_custom_call.1} parent=15 // pred_check_branch
          %485 = sbr.rel (%p483) target = $region64
        $region63: #{tpu_custom_call.1} parent=15 // pred_region
          %p486 = scmp.lt.s32.totalorder %s32, 1
          %s487 = scalar_select %p486, %s32, 1
          %s488 = scalar_lea.vmem %s11, %s487
        $region64: #{tpu_custom_call.1} parent=15 // pred_fallthru
          _
      $region16: #{tpu_custom_call.1} parent=5 // pred_fallthru
        _
      %p489 = scmp.le.s32.totalorder 1, %s24
      %p490 = scmp.lt.s32.totalorder %s24, 5
      %p491 = pnand %p489, %p490
      %p492 = pneg %p491
      // Predicated region
      $region65: #{tpu_custom_call.1} parent=5 // pred_check
        _
      $region66: #{tpu_custom_call.1} parent=5 // pred_check_branch
        %494 = sbr.rel (%p491) target = $region68
      $region67: #{tpu_custom_call.1} parent=5 // pred_region
        %s495 = ssub.s32 %s24, 1
        %s496 = sand.u32 %s257, 1
        %s497 = scalar_lea.sflag [#allocation3], %s496
        %s498 = sand.u32 %s257, 1
        %s499 = smul.addr %s498, 32
        %s500 = scalar_lea.vmem [#allocation2], %s499
        // Predicated region
        $region69: #{tpu_custom_call.1} parent=67 // pred_check
          %p501 = pneg %p270
        $region70: #{tpu_custom_call.1} parent=67 // pred_check_branch
          %503 = sbr.rel (%p501) target = $region72
        $region71: #{tpu_custom_call.1} parent=67 // pred_region
          %504 = dma.done %s497, 512
        $region72: #{tpu_custom_call.1} parent=67 // pred_fallthru
          _
        %s505 = smul.u32 4, %s33
        %p506 = scmp.lt.s32.totalorder %s505, 7
        %s507 = scalar_select %p506, %s505, 7
        %s508 = smul.addr %s507, 8
        %s509 = scalar_lea.vmem %s0, %s508
        %p510 = pneg %p62
        %p511 = pneg %p59
        %p512 = scmp.lt.s32.totalorder %s34, 1
        %s513 = scalar_select %p512, %s34, 1
        %s514 = scalar_lea.vmem %s1, %s513
        %p515 = pneg %p88
        %p516 = pneg %p85
        %p517 = scmp.lt.s32.totalorder %s34, 1
        %s518 = scalar_select %p517, %s34, 1
        %s519 = scalar_lea.vmem %s2, %s518
        %p520 = pneg %p114
        %p521 = pneg %p111
        %p522 = scmp.lt.s32.totalorder %s34, 1
        %s523 = scalar_select %p522, %s34, 1
        %s524 = smul.addr %s523, 4
        %s525 = smul.addr %s524, 8
        %s526 = scalar_lea.vmem %s3, %s525
        %p527 = pneg %p140
        %p528 = pneg %p137
        %p529 = scmp.lt.s32.totalorder %s34, 1
        %s530 = scalar_select %p529, %s34, 1
        %s531 = smul.addr %s530, 4
        %s532 = smul.addr %s531, 8
        %s533 = scalar_lea.vmem %s4, %s532
        %p534 = pneg %p166
        %p535 = pneg %p163
        %p536 = scmp.lt.s32.totalorder %s34, 1
        %s537 = scalar_select %p536, %s34, 1
        %s538 = scalar_lea.vmem %s5, %s537
        %p539 = pneg %p192
        %p540 = pneg %p189
        %p541 = scmp.lt.s32.totalorder %s34, 1
        %s542 = scalar_select %p541, %s34, 1
        %s543 = scalar_lea.vmem %s6, %s542
        %p544 = pneg %p218
        %p545 = pneg %p215
        %p546 = scmp.lt.s32.totalorder %s34, 1
        %s547 = scalar_select %p546, %s34, 1
        %s548 = scalar_lea.vmem %s7, %s547
        %p549 = pneg %p244
        %p550 = pneg %p241
        %s551 = sand.u32 %s257, 1
        %s552 = scalar_lea.sflag [#allocation3], %s551
        %s553 = sand.u32 %s257, 1
        %s554 = smul.addr %s553, 32
        %s555 = scalar_lea.vmem [#allocation2], %s554
        %p556 = pneg %p270
        %p557 = pneg %p267
        %p558 = scmp.lt.s32.totalorder %s34, 1
        %s559 = scalar_select %p558, %s34, 1
        %s560 = scalar_lea.vmem %s9, %s559
        %p561 = pneg %p296
        %p562 = pneg %p293
        %p563 = scmp.lt.s32.totalorder %s34, 1
        %s564 = scalar_select %p563, %s34, 1
        %s565 = smul.addr %s564, 8
        %s566 = smul.addr %s565, 8
        %s567 = scalar_lea.vmem %s10, %s566
        %p568 = pneg %p322
        %p569 = pneg %p319
        %p570 = scmp.lt.s32.totalorder %s34, 1
        %s571 = scalar_select %p570, %s34, 1
        %s572 = scalar_lea.vmem %s11, %s571
        %p573 = pneg %p348
        %p574 = pneg %p345
        %p575 = pneg %p374
        %p576 = pneg %p371
        %s577 = sand.u32 %s361, 1
        %s578 = scalar_lea.sflag [#allocation4], %s577
        %s579 = sand.u32 %s361, 1
        %s580 = smul.addr %s579, 32
        %s581 = scalar_lea.vmem [#allocation5], %s580
        %s582 = smul.u32 4, %s33
        %p583 = scmp.lt.s32.totalorder %s582, 7
        %s584 = scalar_select %p583, %s582, 7
        %s585 = smul.addr %s584, 8
        %s586 = scalar_lea.vmem %s0, %s585
        %s587 = smul.u32 4, %s33
        %p588 = scmp.lt.s32.totalorder %s34, 1
        %s589 = scalar_select %p588, %s34, 1
        %s590 = scalar_lea.vmem %s1, %s589
        %p591 = scmp.lt.s32.totalorder %s34, 1
        %s592 = scalar_select %p591, %s34, 1
        %s593 = scalar_lea.vmem %s2, %s592
        %p594 = scmp.lt.s32.totalorder %s34, 1
        %s595 = scalar_select %p594, %s34, 1
        %s596 = smul.addr %s595, 4
        %s597 = smul.addr %s596, 8
        %s598 = scalar_lea.vmem %s3, %s597
        %p599 = scmp.lt.s32.totalorder %s34, 1
        %s600 = scalar_select %p599, %s34, 1
        %s601 = smul.addr %s600, 4
        %s602 = smul.addr %s601, 8
        %s603 = scalar_lea.vmem %s4, %s602
        %p604 = scmp.lt.s32.totalorder %s34, 1
        %s605 = scalar_select %p604, %s34, 1
        %s606 = scalar_lea.vmem %s5, %s605
        %p607 = scmp.lt.s32.totalorder %s34, 1
        %s608 = scalar_select %p607, %s34, 1
        %s609 = scalar_lea.vmem %s6, %s608
        %p610 = scmp.lt.s32.totalorder %s34, 1
        %s611 = scalar_select %p610, %s34, 1
        %s612 = scalar_lea.vmem %s7, %s611
        %p613 = scmp.lt.s32.totalorder %s34, 1
        %s614 = scalar_select %p613, %s34, 1
        %s615 = scalar_lea.vmem %s9, %s614
        %p616 = scmp.lt.s32.totalorder %s34, 1
        %s617 = scalar_select %p616, %s34, 1
        %s618 = smul.addr %s617, 8
        %s619 = smul.addr %s618, 8
        %s620 = scalar_lea.vmem %s10, %s619
        %p621 = scmp.lt.s32.totalorder %s34, 1
        %s622 = scalar_select %p621, %s34, 1
        %s623 = scalar_lea.vmem %s11, %s622
        %s624 = smul.u32 4, %s33
        %p625 = scmp.eq.s32.totalorder %s34, 0
        // Predicated region
        $region73: #{tpu_custom_call.1} parent=67 // pred_check
          %p626 = pneg %p625
        $region74: #{tpu_custom_call.1} parent=67 // pred_check_branch
          %628 = sbr.rel (%p626) target = $region76
        $region75: #{tpu_custom_call.1} parent=67 // pred_region
          %v629 = vld [vmem:[%s586] sm:$0xff]
          %v630 = vld [vmem:[%s586 + $0x8] sm:$0xff]
          %v631 = vld [vmem:[%s586 + $0x10] sm:$0xff]
          %v632 = vld [vmem:[%s586 + $0x18] sm:$0xff]
          %vm633 = vcmask 261120
          %634 = vst.msk [vmem:[%s581] sm:$0xff] %vm633, %v629
          %635 = vst.msk [vmem:[%s581 + $0x8] sm:$0xff] %vm633, %v630
          %636 = vst.msk [vmem:[%s581 + $0x10] sm:$0xff] %vm633, %v631
          %637 = vst.msk [vmem:[%s581 + $0x18] sm:$0xff] %vm633, %v632
        $region76: #{tpu_custom_call.1} parent=67 // pred_fallthru
          _
        %v638 = vld [vmem:[%s581] sm:$0xff]
        %v639 = vld [vmem:[%s581 + $0x8] sm:$0xff]
        %v640 = vld [vmem:[%s581 + $0x10] sm:$0xff]
        %v641 = vld [vmem:[%s581 + $0x18] sm:$0xff]
        %v642 = vld [vmem:[%s590] sm:$0x1]
        %v643 = vld [vmem:[%s593] sm:$0x1]
        %vm644 = vcmask 261120
        %v645 = vsel %vm644, %v638, 0.0
        %646 = vadd.xlane.f32.xlu0 %v645
        %v647 = vpop.xlane.xlu0 %646
        %v648 = vsel %vm644, %v639, 0.0
        %649 = vadd.xlane.f32.xlu0 %v648
        %v650 = vpop.xlane.xlu0 %649
        %v651 = vsel %vm644, %v640, 0.0
        %652 = vadd.xlane.f32.xlu0 %v651
        %v653 = vpop.xlane.xlu0 %652
        %v654 = vsel %vm644, %v641, 0.0
        %655 = vadd.xlane.f32.xlu0 %v654
        %v656 = vpop.xlane.xlu0 %655
        %v657 = vrcp.pop 32.0
        %v658 = vmul.f32 %v647, %v657
        %v659 = vmul.f32 %v650, %v657
        %v660 = vmul.f32 %v653, %v657
        %v661 = vmul.f32 %v656, %v657
        %v662 = vsub.f32 %v638, %v658
        %v663 = vsub.f32 %v639, %v659
        %v664 = vsub.f32 %v640, %v660
        %v665 = vsub.f32 %v641, %v661
        %v666 = vmul.f32 %v662, %v662
        %v667 = vmul.f32 %v663, %v663
        %v668 = vmul.f32 %v664, %v664
        %v669 = vmul.f32 %v665, %v665
        %v670 = vsel %vm644, %v666, 0.0
        %671 = vadd.xlane.f32.xlu0 %v670
        %v672 = vpop.xlane.xlu0 %671
        %v673 = vsel %vm644, %v667, 0.0
        %674 = vadd.xlane.f32.xlu0 %v673
        %v675 = vpop.xlane.xlu0 %674
        %v676 = vsel %vm644, %v668, 0.0
        %677 = vadd.xlane.f32.xlu0 %v676
        %v678 = vpop.xlane.xlu0 %677
        %v679 = vsel %vm644, %v669, 0.0
        %680 = vadd.xlane.f32.xlu0 %v679
        %v681 = vpop.xlane.xlu0 %680
        %v682 = vmul.f32 %v672, %v657
        %v683 = vmul.f32 %v675, %v657
        %v684 = vmul.f32 %v678, %v657
        %v685 = vmul.f32 %v681, %v657
        %v686 = vadd.f32 %v682, 1e-05
        %v687 = vadd.f32 %v683, 1e-05
        %v688 = vadd.f32 %v684, 1e-05
        %v689 = vadd.f32 %v685, 1e-05
        %v690 = vrsqrt.pop %v686
        %v691 = vrsqrt.pop %v687
        %v692 = vrsqrt.pop %v688
        %v693 = vrsqrt.pop %v689
        %v694 = vmul.f32 %v662, %v690
        %v695 = vmul.f32 %v663, %v691
        %v696 = vmul.f32 %v664, %v692
        %v697 = vmul.f32 %v665, %v693
        %v699 = vlaneseq
        %v700 = vshrl.u32 %v699, 7
        %v701 = vsub.s32 0, %v700
        %v702 = vrot.slane %v642, %v701
        %v704 = vmul.f32 %v694, %v702
        %v705 = vmul.f32 %v695, %v702
        %v706 = vmul.f32 %v696, %v702
        %v707 = vmul.f32 %v697, %v702
        %v709 = vlaneseq
        %v710 = vshrl.u32 %v709, 7
        %v711 = vsub.s32 0, %v710
        %v712 = vrot.slane %v643, %v711
        %v714 = vadd.f32 %v704, %v712
        %v715 = vadd.f32 %v705, %v712
        %v716 = vadd.f32 %v706, %v712
        %v717 = vadd.f32 %v707, %v712
        %v718 = vld [vmem:[%s598] sm:$0xff]
        %v719 = vld [vmem:[%s598 + $0x8] sm:$0xff]
        %v720 = vld [vmem:[%s598 + $0x10] sm:$0xff]
        %v721 = vld [vmem:[%s598 + $0x18] sm:$0xff]
        %v722 = vld [vmem:[%s603] sm:$0xff]
        %v723 = vld [vmem:[%s603 + $0x8] sm:$0xff]
        %v724 = vld [vmem:[%s603 + $0x10] sm:$0xff]
        %v725 = vld [vmem:[%s603 + $0x18] sm:$0xff]
        %v727 = vsel %vm644, %v714, 0
        %v730 = vsel %vm644, %v715, 0
        %v733 = vsel %vm644, %v716, 0
        %v736 = vsel %vm644, %v717, 0
        %738 = vmatprep.subr.mxu0 0.0
        %739 = vmatpush1.msra.mxu0 %v718
        %740 = vmatprep.subr.mxu0 0.0
        %741 = vmatpush1.msra.mxu0 %v719
        %742 = vmatprep.subr.mxu0 0.0
        %743 = vmatpush1.msra.mxu0 %v720
        %744 = vmatprep.subr.mxu0 0.0
        %745 = vmatpush1.msra.mxu0 %v721
        %746 = vmatprep.subr.mxu0 0.0
        %747 = vmatpush1.msra.mxu0 0.0
        %748 = vmatprep.subr.mxu0 0.0
        %749 = vmatpush1.msra.mxu0 0.0
        %750 = vmatprep.subr.mxu0 0.0
        %751 = vmatpush1.msra.mxu0 0.0
        %752 = vmatprep.subr.mxu0 0.0
        %753 = vmatpush1.msra.mxu0 0.0
        %754 = vmatprep.subr.mxu0 0.0
        %755 = vmatpush1.msra.mxu0 0.0
        %756 = vmatprep.subr.mxu0 0.0
        %757 = vmatpush1.msra.mxu0 0.0
        %758 = vmatprep.subr.mxu0 0.0
        %759 = vmatpush1.msra.mxu0 0.0
        %760 = vmatprep.subr.mxu0 0.0
        %761 = vmatpush1.msra.mxu0 0.0
        %762 = vmatprep.subr.mxu0 0.0
        %763 = vmatpush1.msra.mxu0 0.0
        %764 = vmatprep.subr.mxu0 0.0
        %765 = vmatpush1.msra.mxu0 0.0
        %766 = vmatprep.subr.mxu0 0.0
        %767 = vmatpush1.msra.mxu0 0.0
        %768 = vmatprep.subr.mxu0 0.0
        %769 = vmatpush1.msra.mxu0 0.0
        %770 = vmatprep.subr.mxu0 0.0
        %771 = vmatpush1.msra.mxu0 0.0
        %772 = vmatprep.subr.mxu0 0.0
        %773 = vmatpush1.msra.mxu0 0.0
        %774 = vmatprep.subr.mxu0 0.0
        %775 = vmatpush1.msra.mxu0 0.0
        %776 = vmatprep.subr.mxu0 0.0
        %777 = vmatpush1.msra.mxu0 0.0
        %778 = vmatprep.subr.mxu0 0.0
        %779 = vmatpush1.msra.mxu0 0.0
        %780 = vmatprep.subr.mxu0 0.0
        %781 = vmatpush1.msra.mxu0 0.0
        %782 = vmatprep.subr.mxu0 0.0
        %783 = vmatpush1.msra.mxu0 0.0
        %784 = vmatprep.subr.mxu0 0.0
        %785 = vmatpush1.msra.mxu0 0.0
        %786 = vmatprep.subr.mxu0 0.0
        %787 = vmatpush1.msra.mxu0 0.0
        %788 = vmatprep.subr.mxu0 0.0
        %789 = vmatpush1.msra.mxu0 0.0
        %790 = vmatprep.subr.mxu0 0.0
        %791 = vmatpush1.msra.mxu0 0.0
        %792 = vmatprep.subr.mxu0 0.0
        %793 = vmatpush1.msra.mxu0 0.0
        %794 = vmatprep.subr.mxu0 0.0
        %795 = vmatpush1.msra.mxu0 0.0
        %796 = vmatprep.subr.mxu0 0.0
        %797 = vmatpush1.msra.mxu0 0.0
        %798 = vmatprep.subr.mxu0 0.0
        %799 = vmatpush1.msra.mxu0 0.0
        %800 = vmatprep.subr.mxu0 0.0
        %801 = vmatpush1.msra.mxu0 0.0
        %802 = vmatprep.mubr.f32.mxu0 0.0
        %803 = vmatmul.mubr.f32.gmra.mrb[0].mxu0 %v727
        %v804 = vpop.f32.mrb[0].mxu0
        %v805 = vadd.f32 0.0, %v804
        %v806 = vpop.f32.mrb[0].mxu0
        %807 = vmatprep.mubr.f32.mxu0 0.0
        %808 = vmatmul.mubr.f32.gmra.mrb[0].mxu0 %v730
        %v809 = vpop.f32.mrb[0].mxu0
        %v810 = vadd.f32 0.0, %v809
        %v811 = vpop.f32.mrb[0].mxu0
        %812 = vmatprep.mubr.f32.mxu0 0.0
        %813 = vmatmul.mubr.f32.gmra.mrb[0].mxu0 %v733
        %v814 = vpop.f32.mrb[0].mxu0
        %v815 = vadd.f32 0.0, %v814
        %v816 = vpop.f32.mrb[0].mxu0
        %817 = vmatprep.mubr.f32.mxu0 0.0
        %818 = vmatmul.mubr.f32.gmra.mrb[0].mxu0 %v736
        %v819 = vpop.f32.mrb[0].mxu0
        %v820 = vadd.f32 0.0, %v819
        %v821 = vpop.f32.mrb[0].mxu0
        %822 = vdwg.mxu0
        %824 = vrot.lane.b32.xlu0 %v805, 96
        %v825 = vpop.permute.xlu0 %824
        %vm826 = vcmask 130048
        %v827 = vsel %vm826, %v805, 0
        %v829 = vsel %vm826, %v825, 0
        %831 = vmatprep.subr.mxu0 0.0
        %832 = vmatpush1.xpose.msra.mxu0 %v829
        %833 = vmatprep.subr.mxu0 0.0
        %834 = vmatpush1.xpose.msra.mxu0 0.0
        %835 = vmatprep.subr.mxu0 0.0
        %836 = vmatpush1.xpose.msra.mxu0 0.0
        %837 = vmatprep.subr.mxu0 0.0
        %838 = vmatpush1.xpose.msra.mxu0 0.0
        %839 = vmatprep.subr.mxu0 0.0
        %840 = vmatpush1.xpose.msra.mxu0 0.0
        %841 = vmatprep.subr.mxu0 0.0
        %842 = vmatpush1.xpose.msra.mxu0 0.0
        %843 = vmatprep.subr.mxu0 0.0
        %844 = vmatpush1.xpose.msra.mxu0 0.0
        %845 = vmatprep.subr.mxu0 0.0
        %846 = vmatpush1.xpose.msra.mxu0 0.0
        %847 = vmatprep.subr.mxu0 0.0
        %848 = vmatpush1.xpose.msra.mxu0 0.0
        %849 = vmatprep.subr.mxu0 0.0
        %850 = vmatpush1.xpose.msra.mxu0 0.0
        %851 = vmatprep.subr.mxu0 0.0
        %852 = vmatpush1.xpose.msra.mxu0 0.0
        %853 = vmatprep.subr.mxu0 0.0
        %854 = vmatpush1.xpose.msra.mxu0 0.0
        %855 = vmatprep.subr.mxu0 0.0
        %856 = vmatpush1.xpose.msra.mxu0 0.0
        %857 = vmatprep.subr.mxu0 0.0
        %858 = vmatpush1.xpose.msra.mxu0 0.0
        %859 = vmatprep.subr.mxu0 0.0
        %860 = vmatpush1.xpose.msra.mxu0 0.0
        %861 = vmatprep.subr.mxu0 0.0
        %862 = vmatpush1.xpose.msra.mxu0 0.0
        %863 = vmatprep.subr.mxu0 0.0
        %864 = vmatpush1.xpose.msra.mxu0 0.0
        %865 = vmatprep.subr.mxu0 0.0
        %866 = vmatpush1.xpose.msra.mxu0 0.0
        %867 = vmatprep.subr.mxu0 0.0
        %868 = vmatpush1.xpose.msra.mxu0 0.0
        %869 = vmatprep.subr.mxu0 0.0
        %870 = vmatpush1.xpose.msra.mxu0 0.0
        %871 = vmatprep.subr.mxu0 0.0
        %872 = vmatpush1.xpose.msra.mxu0 0.0
        %873 = vmatprep.subr.mxu0 0.0
        %874 = vmatpush1.xpose.msra.mxu0 0.0
        %875 = vmatprep.subr.mxu0 0.0
        %876 = vmatpush1.xpose.msra.mxu0 0.0
        %877 = vmatprep.subr.mxu0 0.0
        %878 = vmatpush1.xpose.msra.mxu0 0.0
        %879 = vmatprep.subr.mxu0 0.0
        %880 = vmatpush1.xpose.msra.mxu0 0.0
        %881 = vmatprep.subr.mxu0 0.0
        %882 = vmatpush1.xpose.msra.mxu0 0.0
        %883 = vmatprep.subr.mxu0 0.0
        %884 = vmatpush1.xpose.msra.mxu0 0.0
        %885 = vmatprep.subr.mxu0 0.0
        %886 = vmatpush1.xpose.msra.mxu0 0.0
        %887 = vmatprep.subr.mxu0 0.0
        %888 = vmatpush1.xpose.msra.mxu0 0.0
        %889 = vmatprep.subr.mxu0 0.0
        %890 = vmatpush1.xpose.msra.mxu0 0.0
        %891 = vmatprep.subr.mxu0 0.0
        %892 = vmatpush1.xpose.msra.mxu0 0.0
        %893 = vmatprep.subr.mxu0 0.0
        %894 = vmatpush1.xpose.msra.mxu0 0.0
        %895 = vmatprep.mubr.f32.mxu0 0.0
        %896 = vmatmul.mubr.f32.gmra.mrb[0].mxu0 %v827
        %v897 = vpop.f32.mrb[0].mxu0
        %v898 = vadd.f32 0.0, %v897
        %v899 = vpop.f32.mrb[0].mxu0
        %900 = vdwg.mxu0
        %902 = vrot.lane.b32.xlu0 %v810, 96
        %v903 = vpop.permute.xlu0 %902
        %v904 = vsel %vm826, %v810, 0
        %v906 = vsel %vm826, %v903, 0
        %908 = vmatprep.subr.mxu0 0.0
        %909 = vmatpush1.xpose.msra.mxu0 %v906
        %910 = vmatprep.subr.mxu0 0.0
        %911 = vmatpush1.xpose.msra.mxu0 0.0
        %912 = vmatprep.subr.mxu0 0.0
        %913 = vmatpush1.xpose.msra.mxu0 0.0
        %914 = vmatprep.subr.mxu0 0.0
        %915 = vmatpush1.xpose.msra.mxu0 0.0
        %916 = vmatprep.subr.mxu0 0.0
        %917 = vmatpush1.xpose.msra.mxu0 0.0
        %918 = vmatprep.subr.mxu0 0.0
        %919 = vmatpush1.xpose.msra.mxu0 0.0
        %920 = vmatprep.subr.mxu0 0.0
        %921 = vmatpush1.xpose.msra.mxu0 0.0
        %922 = vmatprep.subr.mxu0 0.0
        %923 = vmatpush1.xpose.msra.mxu0 0.0
        %924 = vmatprep.subr.mxu0 0.0
        %925 = vmatpush1.xpose.msra.mxu0 0.0
        %926 = vmatprep.subr.mxu0 0.0
        %927 = vmatpush1.xpose.msra.mxu0 0.0
        %928 = vmatprep.subr.mxu0 0.0
        %929 = vmatpush1.xpose.msra.mxu0 0.0
        %930 = vmatprep.subr.mxu0 0.0
        %931 = vmatpush1.xpose.msra.mxu0 0.0
        %932 = vmatprep.subr.mxu0 0.0
        %933 = vmatpush1.xpose.msra.mxu0 0.0
        %934 = vmatprep.subr.mxu0 0.0
        %935 = vmatpush1.xpose.msra.mxu0 0.0
        %936 = vmatprep.subr.mxu0 0.0
        %937 = vmatpush1.xpose.msra.mxu0 0.0
        %938 = vmatprep.subr.mxu0 0.0
        %939 = vmatpush1.xpose.msra.mxu0 0.0
        %940 = vmatprep.subr.mxu0 0.0
        %941 = vmatpush1.xpose.msra.mxu0 0.0
        %942 = vmatprep.subr.mxu0 0.0
        %943 = vmatpush1.xpose.msra.mxu0 0.0
        %944 = vmatprep.subr.mxu0 0.0
        %945 = vmatpush1.xpose.msra.mxu0 0.0
        %946 = vmatprep.subr.mxu0 0.0
        %947 = vmatpush1.xpose.msra.mxu0 0.0
        %948 = vmatprep.subr.mxu0 0.0
        %949 = vmatpush1.xpose.msra.mxu0 0.0
        %950 = vmatprep.subr.mxu0 0.0
        %951 = vmatpush1.xpose.msra.mxu0 0.0
        %952 = vmatprep.subr.mxu0 0.0
        %953 = vmatpush1.xpose.msra.mxu0 0.0
        %954 = vmatprep.subr.mxu0 0.0
        %955 = vmatpush1.xpose.msra.mxu0 0.0
        %956 = vmatprep.subr.mxu0 0.0
        %957 = vmatpush1.xpose.msra.mxu0 0.0
        %958 = vmatprep.subr.mxu0 0.0
        %959 = vmatpush1.xpose.msra.mxu0 0.0
        %960 = vmatprep.subr.mxu0 0.0
        %961 = vmatpush1.xpose.msra.mxu0 0.0
        %962 = vmatprep.subr.mxu0 0.0
        %963 = vmatpush1.xpose.msra.mxu0 0.0
        %964 = vmatprep.subr.mxu0 0.0
        %965 = vmatpush1.xpose.msra.mxu0 0.0
        %966 = vmatprep.subr.mxu0 0.0
        %967 = vmatpush1.xpose.msra.mxu0 0.0
        %968 = vmatprep.subr.mxu0 0.0
        %969 = vmatpush1.xpose.msra.mxu0 0.0
        %970 = vmatprep.subr.mxu0 0.0
        %971 = vmatpush1.xpose.msra.mxu0 0.0
        %972 = vmatprep.mubr.f32.mxu0 0.0
        %973 = vmatmul.mubr.f32.gmra.mrb[0].mxu0 %v904
        %v974 = vpop.f32.mrb[0].mxu0
        %v975 = vadd.f32 0.0, %v974
        %v976 = vpop.f32.mrb[0].mxu0
        %977 = vdwg.mxu0
        %979 = vrot.lane.b32.xlu0 %v815, 96
        %v980 = vpop.permute.xlu0 %979
        %v981 = vsel %vm826, %v815, 0
        %v983 = vsel %vm826, %v980, 0
        %985 = vmatprep.subr.mxu0 0.0
        %986 = vmatpush1.xpose.msra.mxu0 %v983
        %987 = vmatprep.subr.mxu0 0.0
        %988 = vmatpush1.xpose.msra.mxu0 0.0
        %989 = vmatprep.subr.mxu0 0.0
        %990 = vmatpush1.xpose.msra.mxu0 0.0
        %991 = vmatprep.subr.mxu0 0.0
        %992 = vmatpush1.xpose.msra.mxu0 0.0
        %993 = vmatprep.subr.mxu0 0.0
        %994 = vmatpush1.xpose.msra.mxu0 0.0
        %995 = vmatprep.subr.mxu0 0.0
        %996 = vmatpush1.xpose.msra.mxu0 0.0
        %997 = vmatprep.subr.mxu0 0.0
        %998 = vmatpush1.xpose.msra.mxu0 0.0
        %999 = vmatprep.subr.mxu0 0.0
        %1000 = vmatpush1.xpose.msra.mxu0 0.0
        %1001 = vmatprep.subr.mxu0 0.0
        %1002 = vmatpush1.xpose.msra.mxu0 0.0
        %1003 = vmatprep.subr.mxu0 0.0
        %1004 = vmatpush1.xpose.msra.mxu0 0.0
        %1005 = vmatprep.subr.mxu0 0.0
        %1006 = vmatpush1.xpose.msra.mxu0 0.0
        %1007 = vmatprep.subr.mxu0 0.0
        %1008 = vmatpush1.xpose.msra.mxu0 0.0
        %1009 = vmatprep.subr.mxu0 0.0
        %1010 = vmatpush1.xpose.msra.mxu0 0.0
        %1011 = vmatprep.subr.mxu0 0.0
        %1012 = vmatpush1.xpose.msra.mxu0 0.0
        %1013 = vmatprep.subr.mxu0 0.0
        %1014 = vmatpush1.xpose.msra.mxu0 0.0
        %1015 = vmatprep.subr.mxu0 0.0
        %1016 = vmatpush1.xpose.msra.mxu0 0.0
        %1017 = vmatprep.subr.mxu0 0.0
        %1018 = vmatpush1.xpose.msra.mxu0 0.0
        %1019 = vmatprep.subr.mxu0 0.0
        %1020 = vmatpush1.xpose.msra.mxu0 0.0
        %1021 = vmatprep.subr.mxu0 0.0
        %1022 = vmatpush1.xpose.msra.mxu0 0.0
        %1023 = vmatprep.subr.mxu0 0.0
        %1024 = vmatpush1.xpose.msra.mxu0 0.0
        %1025 = vmatprep.subr.mxu0 0.0
        %1026 = vmatpush1.xpose.msra.mxu0 0.0
        %1027 = vmatprep.subr.mxu0 0.0
        %1028 = vmatpush1.xpose.msra.mxu0 0.0
        %1029 = vmatprep.subr.mxu0 0.0
        %1030 = vmatpush1.xpose.msra.mxu0 0.0
        %1031 = vmatprep.subr.mxu0 0.0
        %1032 = vmatpush1.xpose.msra.mxu0 0.0
        %1033 = vmatprep.subr.mxu0 0.0
        %1034 = vmatpush1.xpose.msra.mxu0 0.0
        %1035 = vmatprep.subr.mxu0 0.0
        %1036 = vmatpush1.xpose.msra.mxu0 0.0
        %1037 = vmatprep.subr.mxu0 0.0
        %1038 = vmatpush1.xpose.msra.mxu0 0.0
        %1039 = vmatprep.subr.mxu0 0.0
        %1040 = vmatpush1.xpose.msra.mxu0 0.0
        %1041 = vmatprep.subr.mxu0 0.0
        %1042 = vmatpush1.xpose.msra.mxu0 0.0
        %1043 = vmatprep.subr.mxu0 0.0
        %1044 = vmatpush1.xpose.msra.mxu0 0.0
        %1045 = vmatprep.subr.mxu0 0.0
        %1046 = vmatpush1.xpose.msra.mxu0 0.0
        %1047 = vmatprep.subr.mxu0 0.0
        %1048 = vmatpush1.xpose.msra.mxu0 0.0
        %1049 = vmatprep.mubr.f32.mxu0 0.0
        %1050 = vmatmul.mubr.f32.gmra.mrb[0].mxu0 %v981
        %v1051 = vpop.f32.mrb[0].mxu0
        %v1052 = vadd.f32 0.0, %v1051
        %v1053 = vpop.f32.mrb[0].mxu0
        %1054 = vdwg.mxu0
        %1056 = vrot.lane.b32.xlu0 %v820, 96
        %v1057 = vpop.permute.xlu0 %1056
        %v1058 = vsel %vm826, %v820, 0
        %v1060 = vsel %vm826, %v1057, 0
        %1062 = vmatprep.subr.mxu0 0.0
        %1063 = vmatpush1.xpose.msra.mxu0 %v1060
        %1064 = vmatprep.subr.mxu0 0.0
        %1065 = vmatpush1.xpose.msra.mxu0 0.0
        %1066 = vmatprep.subr.mxu0 0.0
        %1067 = vmatpush1.xpose.msra.mxu0 0.0
        %1068 = vmatprep.subr.mxu0 0.0
        %1069 = vmatpush1.xpose.msra.mxu0 0.0
        %1070 = vmatprep.subr.mxu0 0.0
        %1071 = vmatpush1.xpose.msra.mxu0 0.0
        %1072 = vmatprep.subr.mxu0 0.0
        %1073 = vmatpush1.xpose.msra.mxu0 0.0
        %1074 = vmatprep.subr.mxu0 0.0
        %1075 = vmatpush1.xpose.msra.mxu0 0.0
        %1076 = vmatprep.subr.mxu0 0.0
        %1077 = vmatpush1.xpose.msra.mxu0 0.0
        %1078 = vmatprep.subr.mxu0 0.0
        %1079 = vmatpush1.xpose.msra.mxu0 0.0
        %1080 = vmatprep.subr.mxu0 0.0
        %1081 = vmatpush1.xpose.msra.mxu0 0.0
        %1082 = vmatprep.subr.mxu0 0.0
        %1083 = vmatpush1.xpose.msra.mxu0 0.0
        %1084 = vmatprep.subr.mxu0 0.0
        %1085 = vmatpush1.xpose.msra.mxu0 0.0
        %1086 = vmatprep.subr.mxu0 0.0
        %1087 = vmatpush1.xpose.msra.mxu0 0.0
        %1088 = vmatprep.subr.mxu0 0.0
        %1089 = vmatpush1.xpose.msra.mxu0 0.0
        %1090 = vmatprep.subr.mxu0 0.0
        %1091 = vmatpush1.xpose.msra.mxu0 0.0
        %1092 = vmatprep.subr.mxu0 0.0
        %1093 = vmatpush1.xpose.msra.mxu0 0.0
        %1094 = vmatprep.subr.mxu0 0.0
        %1095 = vmatpush1.xpose.msra.mxu0 0.0
        %1096 = vmatprep.subr.mxu0 0.0
        %1097 = vmatpush1.xpose.msra.mxu0 0.0
        %1098 = vmatprep.subr.mxu0 0.0
        %1099 = vmatpush1.xpose.msra.mxu0 0.0
        %1100 = vmatprep.subr.mxu0 0.0
        %1101 = vmatpush1.xpose.msra.mxu0 0.0
        %1102 = vmatprep.subr.mxu0 0.0
        %1103 = vmatpush1.xpose.msra.mxu0 0.0
        %1104 = vmatprep.subr.mxu0 0.0
        %1105 = vmatpush1.xpose.msra.mxu0 0.0
        %1106 = vmatprep.subr.mxu0 0.0
        %1107 = vmatpush1.xpose.msra.mxu0 0.0
        %1108 = vmatprep.subr.mxu0 0.0
        %1109 = vmatpush1.xpose.msra.mxu0 0.0
        %1110 = vmatprep.subr.mxu0 0.0
        %1111 = vmatpush1.xpose.msra.mxu0 0.0
        %1112 = vmatprep.subr.mxu0 0.0
        %1113 = vmatpush1.xpose.msra.mxu0 0.0
        %1114 = vmatprep.subr.mxu0 0.0
        %1115 = vmatpush1.xpose.msra.mxu0 0.0
        %1116 = vmatprep.subr.mxu0 0.0
        %1117 = vmatpush1.xpose.msra.mxu0 0.0
        %1118 = vmatprep.subr.mxu0 0.0
        %1119 = vmatpush1.xpose.msra.mxu0 0.0
        %1120 = vmatprep.subr.mxu0 0.0
        %1121 = vmatpush1.xpose.msra.mxu0 0.0
        %1122 = vmatprep.subr.mxu0 0.0
        %1123 = vmatpush1.xpose.msra.mxu0 0.0
        %1124 = vmatprep.subr.mxu0 0.0
        %1125 = vmatpush1.xpose.msra.mxu0 0.0
        %1126 = vmatprep.mubr.f32.mxu0 0.0
        %1127 = vmatmul.mubr.f32.gmra.mrb[0].mxu0 %v1058
        %v1128 = vpop.f32.mrb[0].mxu0
        %v1129 = vadd.f32 0.0, %v1128
        %v1130 = vpop.f32.mrb[0].mxu0
        %1131 = vdwg.mxu0
        %v1132 = vmul.f32 %v898, 0.25
        %v1133 = vmul.f32 %v975, 0.25
        %v1134 = vmul.f32 %v1052, 0.25
        %v1135 = vmul.f32 %v1129, 0.25
        %vm1136 = vcmask 64512
        %v1137 = vsel %vm1136, %v1132, -inf
        %1138 = vmax.xlane.f32.xlu0 %v1137
        %v1139 = vpop.xlane.xlu0 %1138
        %v1140 = vsel %vm1136, %v1133, -inf
        %1141 = vmax.xlane.f32.xlu0 %v1140
        %v1142 = vpop.xlane.xlu0 %1141
        %v1143 = vsel %vm1136, %v1134, -inf
        %1144 = vmax.xlane.f32.xlu0 %v1143
        %v1145 = vpop.xlane.xlu0 %1144
        %v1146 = vsel %vm1136, %v1135, -inf
        %1147 = vmax.xlane.f32.xlu0 %v1146
        %v1148 = vpop.xlane.xlu0 %1147
        %v1149 = vsub.f32 %v1132, %v1139
        %v1150 = vsub.f32 %v1133, %v1142
        %v1151 = vsub.f32 %v1134, %v1145
        %v1152 = vsub.f32 %v1135, %v1148
        %v1153 = vmul.f32 %v1149, 1.442695
        %v1154 = vpow.pop %v1153
        %v1155 = vmul.f32 %v1150, 1.442695
        %v1156 = vpow.pop %v1155
        %v1157 = vmul.f32 %v1151, 1.442695
        %v1158 = vpow.pop %v1157
        %v1159 = vmul.f32 %v1152, 1.442695
        %v1160 = vpow.pop %v1159
        %v1161 = vsel %vm1136, %v1154, 0.0
        %1162 = vadd.xlane.f32.xlu0 %v1161
        %v1163 = vpop.xlane.xlu0 %1162
        %v1164 = vsel %vm1136, %v1156, 0.0
        %1165 = vadd.xlane.f32.xlu0 %v1164
        %v1166 = vpop.xlane.xlu0 %1165
        %v1167 = vsel %vm1136, %v1158, 0.0
        %1168 = vadd.xlane.f32.xlu0 %v1167
        %v1169 = vpop.xlane.xlu0 %1168
        %v1170 = vsel %vm1136, %v1160, 0.0
        %1171 = vadd.xlane.f32.xlu0 %v1170
        %v1172 = vpop.xlane.xlu0 %1171
        %v1173 = vrcp.pop %v1163
        %v1174 = vrcp.pop %v1166
        %v1175 = vrcp.pop %v1169
        %v1176 = vrcp.pop %v1172
        %v1177 = vmul.f32 %v1154, %v1173
        %v1178 = vmul.f32 %v1156, %v1174
        %v1179 = vmul.f32 %v1158, %v1175
        %v1180 = vmul.f32 %v1160, %v1176
        %1181 = vrot.lane.b32.xlu0 %v805, 64
        %v1182 = vpop.permute.xlu0 %1181
        %v1185 = vsel %vm1136, %v1177, 0
        %1187 = vmatprep.subr.mxu0 0.0
        %1188 = vmatpush1.msra.mxu0 %v1182
        %1189 = vmatprep.subr.mxu0 0.0
        %1190 = vmatpush1.msra.mxu0 0.0
        %1191 = vmatprep.subr.mxu0 0.0
        %1192 = vmatpush1.msra.mxu0 0.0
        %1193 = vmatprep.subr.mxu0 0.0
        %1194 = vmatpush1.msra.mxu0 0.0
        %1195 = vmatprep.subr.mxu0 0.0
        %1196 = vmatpush1.msra.mxu0 0.0
        %1197 = vmatprep.subr.mxu0 0.0
        %1198 = vmatpush1.msra.mxu0 0.0
        %1199 = vmatprep.subr.mxu0 0.0
        %1200 = vmatpush1.msra.mxu0 0.0
        %1201 = vmatprep.subr.mxu0 0.0
        %1202 = vmatpush1.msra.mxu0 0.0
        %1203 = vmatprep.subr.mxu0 0.0
        %1204 = vmatpush1.msra.mxu0 0.0
        %1205 = vmatprep.subr.mxu0 0.0
        %1206 = vmatpush1.msra.mxu0 0.0
        %1207 = vmatprep.subr.mxu0 0.0
        %1208 = vmatpush1.msra.mxu0 0.0
        %1209 = vmatprep.subr.mxu0 0.0
        %1210 = vmatpush1.msra.mxu0 0.0
        %1211 = vmatprep.subr.mxu0 0.0
        %1212 = vmatpush1.msra.mxu0 0.0
        %1213 = vmatprep.subr.mxu0 0.0
        %1214 = vmatpush1.msra.mxu0 0.0
        %1215 = vmatprep.subr.mxu0 0.0
        %1216 = vmatpush1.msra.mxu0 0.0
        %1217 = vmatprep.subr.mxu0 0.0
        %1218 = vmatpush1.msra.mxu0 0.0
        %1219 = vmatprep.subr.mxu0 0.0
        %1220 = vmatpush1.msra.mxu0 0.0
        %1221 = vmatprep.subr.mxu0 0.0
        %1222 = vmatpush1.msra.mxu0 0.0
        %1223 = vmatprep.subr.mxu0 0.0
        %1224 = vmatpush1.msra.mxu0 0.0
        %1225 = vmatprep.subr.mxu0 0.0
        %1226 = vmatpush1.msra.mxu0 0.0
        %1227 = vmatprep.subr.mxu0 0.0
        %1228 = vmatpush1.msra.mxu0 0.0
        %1229 = vmatprep.subr.mxu0 0.0
        %1230 = vmatpush1.msra.mxu0 0.0
        %1231 = vmatprep.subr.mxu0 0.0
        %1232 = vmatpush1.msra.mxu0 0.0
        %1233 = vmatprep.subr.mxu0 0.0
        %1234 = vmatpush1.msra.mxu0 0.0
        %1235 = vmatprep.subr.mxu0 0.0
        %1236 = vmatpush1.msra.mxu0 0.0
        %1237 = vmatprep.subr.mxu0 0.0
        %1238 = vmatpush1.msra.mxu0 0.0
        %1239 = vmatprep.subr.mxu0 0.0
        %1240 = vmatpush1.msra.mxu0 0.0
        %1241 = vmatprep.subr.mxu0 0.0
        %1242 = vmatpush1.msra.mxu0 0.0
        %1243 = vmatprep.subr.mxu0 0.0
        %1244 = vmatpush1.msra.mxu0 0.0
        %1245 = vmatprep.subr.mxu0 0.0
        %1246 = vmatpush1.msra.mxu0 0.0
        %1247 = vmatprep.subr.mxu0 0.0
        %1248 = vmatpush1.msra.mxu0 0.0
        %1249 = vmatprep.subr.mxu0 0.0
        %1250 = vmatpush1.msra.mxu0 0.0
        %1251 = vmatprep.mubr.f32.mxu0 0.0
        %1252 = vmatmul.mubr.f32.gmra.mrb[0].mxu0 %v1185
        %v1253 = vpop.f32.mrb[0].mxu0
        %v1254 = vadd.f32 0.0, %v1253
        %v1255 = vpop.f32.mrb[0].mxu0
        %1256 = vdwg.mxu0
        %1257 = vrot.lane.b32.xlu0 %v810, 64
        %v1258 = vpop.permute.xlu0 %1257
        %v1261 = vsel %vm1136, %v1178, 0
        %1263 = vmatprep.subr.mxu0 0.0
        %1264 = vmatpush1.msra.mxu0 %v1258
        %1265 = vmatprep.subr.mxu0 0.0
        %1266 = vmatpush1.msra.mxu0 0.0
        %1267 = vmatprep.subr.mxu0 0.0
        %1268 = vmatpush1.msra.mxu0 0.0
        %1269 = vmatprep.subr.mxu0 0.0
        %1270 = vmatpush1.msra.mxu0 0.0
        %1271 = vmatprep.subr.mxu0 0.0
        %1272 = vmatpush1.msra.mxu0 0.0
        %1273 = vmatprep.subr.mxu0 0.0
        %1274 = vmatpush1.msra.mxu0 0.0
        %1275 = vmatprep.subr.mxu0 0.0
        %1276 = vmatpush1.msra.mxu0 0.0
        %1277 = vmatprep.subr.mxu0 0.0
        %1278 = vmatpush1.msra.mxu0 0.0
        %1279 = vmatprep.subr.mxu0 0.0
        %1280 = vmatpush1.msra.mxu0 0.0
        %1281 = vmatprep.subr.mxu0 0.0
        %1282 = vmatpush1.msra.mxu0 0.0
        %1283 = vmatprep.subr.mxu0 0.0
        %1284 = vmatpush1.msra.mxu0 0.0
        %1285 = vmatprep.subr.mxu0 0.0
        %1286 = vmatpush1.msra.mxu0 0.0
        %1287 = vmatprep.subr.mxu0 0.0
        %1288 = vmatpush1.msra.mxu0 0.0
        %1289 = vmatprep.subr.mxu0 0.0
        %1290 = vmatpush1.msra.mxu0 0.0
        %1291 = vmatprep.subr.mxu0 0.0
        %1292 = vmatpush1.msra.mxu0 0.0
        %1293 = vmatprep.subr.mxu0 0.0
        %1294 = vmatpush1.msra.mxu0 0.0
        %1295 = vmatprep.subr.mxu0 0.0
        %1296 = vmatpush1.msra.mxu0 0.0
        %1297 = vmatprep.subr.mxu0 0.0
        %1298 = vmatpush1.msra.mxu0 0.0
        %1299 = vmatprep.subr.mxu0 0.0
        %1300 = vmatpush1.msra.mxu0 0.0
        %1301 = vmatprep.subr.mxu0 0.0
        %1302 = vmatpush1.msra.mxu0 0.0
        %1303 = vmatprep.subr.mxu0 0.0
        %1304 = vmatpush1.msra.mxu0 0.0
        %1305 = vmatprep.subr.mxu0 0.0
        %1306 = vmatpush1.msra.mxu0 0.0
        %1307 = vmatprep.subr.mxu0 0.0
        %1308 = vmatpush1.msra.mxu0 0.0
        %1309 = vmatprep.subr.mxu0 0.0
        %1310 = vmatpush1.msra.mxu0 0.0
        %1311 = vmatprep.subr.mxu0 0.0
        %1312 = vmatpush1.msra.mxu0 0.0
        %1313 = vmatprep.subr.mxu0 0.0
        %1314 = vmatpush1.msra.mxu0 0.0
        %1315 = vmatprep.subr.mxu0 0.0
        %1316 = vmatpush1.msra.mxu0 0.0
        %1317 = vmatprep.subr.mxu0 0.0
        %1318 = vmatpush1.msra.mxu0 0.0
        %1319 = vmatprep.subr.mxu0 0.0
        %1320 = vmatpush1.msra.mxu0 0.0
        %1321 = vmatprep.subr.mxu0 0.0
        %1322 = vmatpush1.msra.mxu0 0.0
        %1323 = vmatprep.subr.mxu0 0.0
        %1324 = vmatpush1.msra.mxu0 0.0
        %1325 = vmatprep.subr.mxu0 0.0
        %1326 = vmatpush1.msra.mxu0 0.0
        %1327 = vmatprep.mubr.f32.mxu0 0.0
        %1328 = vmatmul.mubr.f32.gmra.mrb[0].mxu0 %v1261
        %v1329 = vpop.f32.mrb[0].mxu0
        %v1330 = vadd.f32 0.0, %v1329
        %v1331 = vpop.f32.mrb[0].mxu0
        %1332 = vdwg.mxu0
        %1333 = vrot.lane.b32.xlu0 %v815, 64
        %v1334 = vpop.permute.xlu0 %1333
        %v1337 = vsel %vm1136, %v1179, 0
        %1339 = vmatprep.subr.mxu0 0.0
        %1340 = vmatpush1.msra.mxu0 %v1334
        %1341 = vmatprep.subr.mxu0 0.0
        %1342 = vmatpush1.msra.mxu0 0.0
        %1343 = vmatprep.subr.mxu0 0.0
        %1344 = vmatpush1.msra.mxu0 0.0
        %1345 = vmatprep.subr.mxu0 0.0
        %1346 = vmatpush1.msra.mxu0 0.0
        %1347 = vmatprep.subr.mxu0 0.0
        %1348 = vmatpush1.msra.mxu0 0.0
        %1349 = vmatprep.subr.mxu0 0.0
        %1350 = vmatpush1.msra.mxu0 0.0
        %1351 = vmatprep.subr.mxu0 0.0
        %1352 = vmatpush1.msra.mxu0 0.0
        %1353 = vmatprep.subr.mxu0 0.0
        %1354 = vmatpush1.msra.mxu0 0.0
        %1355 = vmatprep.subr.mxu0 0.0
        %1356 = vmatpush1.msra.mxu0 0.0
        %1357 = vmatprep.subr.mxu0 0.0
        %1358 = vmatpush1.msra.mxu0 0.0
        %1359 = vmatprep.subr.mxu0 0.0
        %1360 = vmatpush1.msra.mxu0 0.0
        %1361 = vmatprep.subr.mxu0 0.0
        %1362 = vmatpush1.msra.mxu0 0.0
        %1363 = vmatprep.subr.mxu0 0.0
        %1364 = vmatpush1.msra.mxu0 0.0
        %1365 = vmatprep.subr.mxu0 0.0
        %1366 = vmatpush1.msra.mxu0 0.0
        %1367 = vmatprep.subr.mxu0 0.0
        %1368 = vmatpush1.msra.mxu0 0.0
        %1369 = vmatprep.subr.mxu0 0.0
        %1370 = vmatpush1.msra.mxu0 0.0
        %1371 = vmatprep.subr.mxu0 0.0
        %1372 = vmatpush1.msra.mxu0 0.0
        %1373 = vmatprep.subr.mxu0 0.0
        %1374 = vmatpush1.msra.mxu0 0.0
        %1375 = vmatprep.subr.mxu0 0.0
        %1376 = vmatpush1.msra.mxu0 0.0
        %1377 = vmatprep.subr.mxu0 0.0
        %1378 = vmatpush1.msra.mxu0 0.0
        %1379 = vmatprep.subr.mxu0 0.0
        %1380 = vmatpush1.msra.mxu0 0.0
        %1381 = vmatprep.subr.mxu0 0.0
        %1382 = vmatpush1.msra.mxu0 0.0
        %1383 = vmatprep.subr.mxu0 0.0
        %1384 = vmatpush1.msra.mxu0 0.0
        %1385 = vmatprep.subr.mxu0 0.0
        %1386 = vmatpush1.msra.mxu0 0.0
        %1387 = vmatprep.subr.mxu0 0.0
        %1388 = vmatpush1.msra.mxu0 0.0
        %1389 = vmatprep.subr.mxu0 0.0
        %1390 = vmatpush1.msra.mxu0 0.0
        %1391 = vmatprep.subr.mxu0 0.0
        %1392 = vmatpush1.msra.mxu0 0.0
        %1393 = vmatprep.subr.mxu0 0.0
        %1394 = vmatpush1.msra.mxu0 0.0
        %1395 = vmatprep.subr.mxu0 0.0
        %1396 = vmatpush1.msra.mxu0 0.0
        %1397 = vmatprep.subr.mxu0 0.0
        %1398 = vmatpush1.msra.mxu0 0.0
        %1399 = vmatprep.subr.mxu0 0.0
        %1400 = vmatpush1.msra.mxu0 0.0
        %1401 = vmatprep.subr.mxu0 0.0
        %1402 = vmatpush1.msra.mxu0 0.0
        %1403 = vmatprep.mubr.f32.mxu0 0.0
        %1404 = vmatmul.mubr.f32.gmra.mrb[0].mxu0 %v1337
        %v1405 = vpop.f32.mrb[0].mxu0
        %v1406 = vadd.f32 0.0, %v1405
        %v1407 = vpop.f32.mrb[0].mxu0
        %1408 = vdwg.mxu0
        %1409 = vrot.lane.b32.xlu0 %v820, 64
        %v1410 = vpop.permute.xlu0 %1409
        %v1413 = vsel %vm1136, %v1180, 0
        %1415 = vmatprep.subr.mxu0 0.0
        %1416 = vmatpush1.msra.mxu0 %v1410
        %1417 = vmatprep.subr.mxu0 0.0
        %1418 = vmatpush1.msra.mxu0 0.0
        %1419 = vmatprep.subr.mxu0 0.0
        %1420 = vmatpush1.msra.mxu0 0.0
        %1421 = vmatprep.subr.mxu0 0.0
        %1422 = vmatpush1.msra.mxu0 0.0
        %1423 = vmatprep.subr.mxu0 0.0
        %1424 = vmatpush1.msra.mxu0 0.0
        %1425 = vmatprep.subr.mxu0 0.0
        %1426 = vmatpush1.msra.mxu0 0.0
        %1427 = vmatprep.subr.mxu0 0.0
        %1428 = vmatpush1.msra.mxu0 0.0
        %1429 = vmatprep.subr.mxu0 0.0
        %1430 = vmatpush1.msra.mxu0 0.0
        %1431 = vmatprep.subr.mxu0 0.0
        %1432 = vmatpush1.msra.mxu0 0.0
        %1433 = vmatprep.subr.mxu0 0.0
        %1434 = vmatpush1.msra.mxu0 0.0
        %1435 = vmatprep.subr.mxu0 0.0
        %1436 = vmatpush1.msra.mxu0 0.0
        %1437 = vmatprep.subr.mxu0 0.0
        %1438 = vmatpush1.msra.mxu0 0.0
        %1439 = vmatprep.subr.mxu0 0.0
        %1440 = vmatpush1.msra.mxu0 0.0
        %1441 = vmatprep.subr.mxu0 0.0
        %1442 = vmatpush1.msra.mxu0 0.0
        %1443 = vmatprep.subr.mxu0 0.0
        %1444 = vmatpush1.msra.mxu0 0.0
        %1445 = vmatprep.subr.mxu0 0.0
        %1446 = vmatpush1.msra.mxu0 0.0
        %1447 = vmatprep.subr.mxu0 0.0
        %1448 = vmatpush1.msra.mxu0 0.0
        %1449 = vmatprep.subr.mxu0 0.0
        %1450 = vmatpush1.msra.mxu0 0.0
        %1451 = vmatprep.subr.mxu0 0.0
        %1452 = vmatpush1.msra.mxu0 0.0
        %1453 = vmatprep.subr.mxu0 0.0
        %1454 = vmatpush1.msra.mxu0 0.0
        %1455 = vmatprep.subr.mxu0 0.0
        %1456 = vmatpush1.msra.mxu0 0.0
        %1457 = vmatprep.subr.mxu0 0.0
        %1458 = vmatpush1.msra.mxu0 0.0
        %1459 = vmatprep.subr.mxu0 0.0
        %1460 = vmatpush1.msra.mxu0 0.0
        %1461 = vmatprep.subr.mxu0 0.0
        %1462 = vmatpush1.msra.mxu0 0.0
        %1463 = vmatprep.subr.mxu0 0.0
        %1464 = vmatpush1.msra.mxu0 0.0
        %1465 = vmatprep.subr.mxu0 0.0
        %1466 = vmatpush1.msra.mxu0 0.0
        %1467 = vmatprep.subr.mxu0 0.0
        %1468 = vmatpush1.msra.mxu0 0.0
        %1469 = vmatprep.subr.mxu0 0.0
        %1470 = vmatpush1.msra.mxu0 0.0
        %1471 = vmatprep.subr.mxu0 0.0
        %1472 = vmatpush1.msra.mxu0 0.0
        %1473 = vmatprep.subr.mxu0 0.0
        %1474 = vmatpush1.msra.mxu0 0.0
        %1475 = vmatprep.subr.mxu0 0.0
        %1476 = vmatpush1.msra.mxu0 0.0
        %1477 = vmatprep.subr.mxu0 0.0
        %1478 = vmatpush1.msra.mxu0 0.0
        %1479 = vmatprep.mubr.f32.mxu0 0.0
        %1480 = vmatmul.mubr.f32.gmra.mrb[0].mxu0 %v1413
        %v1481 = vpop.f32.mrb[0].mxu0
        %v1482 = vadd.f32 0.0, %v1481
        %v1483 = vpop.f32.mrb[0].mxu0
        %1484 = vdwg.mxu0
        %1485 = vrot.lane.b32.xlu0 %v805, 112
        %v1486 = vpop.permute.xlu0 %1485
        %1487 = vrot.lane.b32.xlu0 %v805, 80
        %v1488 = vpop.permute.xlu0 %1487
        %v1489 = vsel %vm826, %v1486, 0
        %v1491 = vsel %vm826, %v1488, 0
        %1493 = vmatprep.subr.mxu0 0.0
        %1494 = vmatpush1.xpose.msra.mxu0 %v1491
        %1495 = vmatprep.subr.mxu0 0.0
        %1496 = vmatpush1.xpose.msra.mxu0 0.0
        %1497 = vmatprep.subr.mxu0 0.0
        %1498 = vmatpush1.xpose.msra.mxu0 0.0
        %1499 = vmatprep.subr.mxu0 0.0
        %1500 = vmatpush1.xpose.msra.mxu0 0.0
        %1501 = vmatprep.subr.mxu0 0.0
        %1502 = vmatpush1.xpose.msra.mxu0 0.0
        %1503 = vmatprep.subr.mxu0 0.0
        %1504 = vmatpush1.xpose.msra.mxu0 0.0
        %1505 = vmatprep.subr.mxu0 0.0
        %1506 = vmatpush1.xpose.msra.mxu0 0.0
        %1507 = vmatprep.subr.mxu0 0.0
        %1508 = vmatpush1.xpose.msra.mxu0 0.0
        %1509 = vmatprep.subr.mxu0 0.0
        %1510 = vmatpush1.xpose.msra.mxu0 0.0
        %1511 = vmatprep.subr.mxu0 0.0
        %1512 = vmatpush1.xpose.msra.mxu0 0.0
        %1513 = vmatprep.subr.mxu0 0.0
        %1514 = vmatpush1.xpose.msra.mxu0 0.0
        %1515 = vmatprep.subr.mxu0 0.0
        %1516 = vmatpush1.xpose.msra.mxu0 0.0
        %1517 = vmatprep.subr.mxu0 0.0
        %1518 = vmatpush1.xpose.msra.mxu0 0.0
        %1519 = vmatprep.subr.mxu0 0.0
        %1520 = vmatpush1.xpose.msra.mxu0 0.0
        %1521 = vmatprep.subr.mxu0 0.0
        %1522 = vmatpush1.xpose.msra.mxu0 0.0
        %1523 = vmatprep.subr.mxu0 0.0
        %1524 = vmatpush1.xpose.msra.mxu0 0.0
        %1525 = vmatprep.subr.mxu0 0.0
        %1526 = vmatpush1.xpose.msra.mxu0 0.0
        %1527 = vmatprep.subr.mxu0 0.0
        %1528 = vmatpush1.xpose.msra.mxu0 0.0
        %1529 = vmatprep.subr.mxu0 0.0
        %1530 = vmatpush1.xpose.msra.mxu0 0.0
        %1531 = vmatprep.subr.mxu0 0.0
        %1532 = vmatpush1.xpose.msra.mxu0 0.0
        %1533 = vmatprep.subr.mxu0 0.0
        %1534 = vmatpush1.xpose.msra.mxu0 0.0
        %1535 = vmatprep.subr.mxu0 0.0
        %1536 = vmatpush1.xpose.msra.mxu0 0.0
        %1537 = vmatprep.subr.mxu0 0.0
        %1538 = vmatpush1.xpose.msra.mxu0 0.0
        %1539 = vmatprep.subr.mxu0 0.0
        %1540 = vmatpush1.xpose.msra.mxu0 0.0
        %1541 = vmatprep.subr.mxu0 0.0
        %1542 = vmatpush1.xpose.msra.mxu0 0.0
        %1543 = vmatprep.subr.mxu0 0.0
        %1544 = vmatpush1.xpose.msra.mxu0 0.0
        %1545 = vmatprep.subr.mxu0 0.0
        %1546 = vmatpush1.xpose.msra.mxu0 0.0
        %1547 = vmatprep.subr.mxu0 0.0
        %1548 = vmatpush1.xpose.msra.mxu0 0.0
        %1549 = vmatprep.subr.mxu0 0.0
        %1550 = vmatpush1.xpose.msra.mxu0 0.0
        %1551 = vmatprep.subr.mxu0 0.0
        %1552 = vmatpush1.xpose.msra.mxu0 0.0
        %1553 = vmatprep.subr.mxu0 0.0
        %1554 = vmatpush1.xpose.msra.mxu0 0.0
        %1555 = vmatprep.subr.mxu0 0.0
        %1556 = vmatpush1.xpose.msra.mxu0 0.0
        %1557 = vmatprep.mubr.f32.mxu0 0.0
        %1558 = vmatmul.mubr.f32.gmra.mrb[0].mxu0 %v1489
        %v1559 = vpop.f32.mrb[0].mxu0
        %v1560 = vadd.f32 0.0, %v1559
        %v1561 = vpop.f32.mrb[0].mxu0
        %1562 = vdwg.mxu0
        %1563 = vrot.lane.b32.xlu0 %v810, 112
        %v1564 = vpop.permute.xlu0 %1563
        %1565 = vrot.lane.b32.xlu0 %v810, 80
        %v1566 = vpop.permute.xlu0 %1565
        %v1567 = vsel %vm826, %v1564, 0
        %v1569 = vsel %vm826, %v1566, 0
        %1571 = vmatprep.subr.mxu0 0.0
        %1572 = vmatpush1.xpose.msra.mxu0 %v1569
        %1573 = vmatprep.subr.mxu0 0.0
        %1574 = vmatpush1.xpose.msra.mxu0 0.0
        %1575 = vmatprep.subr.mxu0 0.0
        %1576 = vmatpush1.xpose.msra.mxu0 0.0
        %1577 = vmatprep.subr.mxu0 0.0
        %1578 = vmatpush1.xpose.msra.mxu0 0.0
        %1579 = vmatprep.subr.mxu0 0.0
        %1580 = vmatpush1.xpose.msra.mxu0 0.0
        %1581 = vmatprep.subr.mxu0 0.0
        %1582 = vmatpush1.xpose.msra.mxu0 0.0
        %1583 = vmatprep.subr.mxu0 0.0
        %1584 = vmatpush1.xpose.msra.mxu0 0.0
        %1585 = vmatprep.subr.mxu0 0.0
        %1586 = vmatpush1.xpose.msra.mxu0 0.0
        %1587 = vmatprep.subr.mxu0 0.0
        %1588 = vmatpush1.xpose.msra.mxu0 0.0
        %1589 = vmatprep.subr.mxu0 0.0
        %1590 = vmatpush1.xpose.msra.mxu0 0.0
        %1591 = vmatprep.subr.mxu0 0.0
        %1592 = vmatpush1.xpose.msra.mxu0 0.0
        %1593 = vmatprep.subr.mxu0 0.0
        %1594 = vmatpush1.xpose.msra.mxu0 0.0
        %1595 = vmatprep.subr.mxu0 0.0
        %1596 = vmatpush1.xpose.msra.mxu0 0.0
        %1597 = vmatprep.subr.mxu0 0.0
        %1598 = vmatpush1.xpose.msra.mxu0 0.0
        %1599 = vmatprep.subr.mxu0 0.0
        %1600 = vmatpush1.xpose.msra.mxu0 0.0
        %1601 = vmatprep.subr.mxu0 0.0
        %1602 = vmatpush1.xpose.msra.mxu0 0.0
        %1603 = vmatprep.subr.mxu0 0.0
        %1604 = vmatpush1.xpose.msra.mxu0 0.0
        %1605 = vmatprep.subr.mxu0 0.0
        %1606 = vmatpush1.xpose.msra.mxu0 0.0
        %1607 = vmatprep.subr.mxu0 0.0
        %1608 = vmatpush1.xpose.msra.mxu0 0.0
        %1609 = vmatprep.subr.mxu0 0.0
        %1610 = vmatpush1.xpose.msra.mxu0 0.0
        %1611 = vmatprep.subr.mxu0 0.0
        %1612 = vmatpush1.xpose.msra.mxu0 0.0
        %1613 = vmatprep.subr.mxu0 0.0
        %1614 = vmatpush1.xpose.msra.mxu0 0.0
        %1615 = vmatprep.subr.mxu0 0.0
        %1616 = vmatpush1.xpose.msra.mxu0 0.0
        %1617 = vmatprep.subr.mxu0 0.0
        %1618 = vmatpush1.xpose.msra.mxu0 0.0
        %1619 = vmatprep.subr.mxu0 0.0
        %1620 = vmatpush1.xpose.msra.mxu0 0.0
        %1621 = vmatprep.subr.mxu0 0.0
        %1622 = vmatpush1.xpose.msra.mxu0 0.0
        %1623 = vmatprep.subr.mxu0 0.0
        %1624 = vmatpush1.xpose.msra.mxu0 0.0
        %1625 = vmatprep.subr.mxu0 0.0
        %1626 = vmatpush1.xpose.msra.mxu0 0.0
        %1627 = vmatprep.subr.mxu0 0.0
        %1628 = vmatpush1.xpose.msra.mxu0 0.0
        %1629 = vmatprep.subr.mxu0 0.0
        %1630 = vmatpush1.xpose.msra.mxu0 0.0
        %1631 = vmatprep.subr.mxu0 0.0
        %1632 = vmatpush1.xpose.msra.mxu0 0.0
        %1633 = vmatprep.subr.mxu0 0.0
        %1634 = vmatpush1.xpose.msra.mxu0 0.0
        %1635 = vmatprep.mubr.f32.mxu0 0.0
        %1636 = vmatmul.mubr.f32.gmra.mrb[0].mxu0 %v1567
        %v1637 = vpop.f32.mrb[0].mxu0
        %v1638 = vadd.f32 0.0, %v1637
        %v1639 = vpop.f32.mrb[0].mxu0
        %1640 = vdwg.mxu0
        %1641 = vrot.lane.b32.xlu0 %v815, 112
        %v1642 = vpop.permute.xlu0 %1641
        %1643 = vrot.lane.b32.xlu0 %v815, 80
        %v1644 = vpop.permute.xlu0 %1643
        %v1645 = vsel %vm826, %v1642, 0
        %v1647 = vsel %vm826, %v1644, 0
        %1649 = vmatprep.subr.mxu0 0.0
        %1650 = vmatpush1.xpose.msra.mxu0 %v1647
        %1651 = vmatprep.subr.mxu0 0.0
        %1652 = vmatpush1.xpose.msra.mxu0 0.0
        %1653 = vmatprep.subr.mxu0 0.0
        %1654 = vmatpush1.xpose.msra.mxu0 0.0
        %1655 = vmatprep.subr.mxu0 0.0
        %1656 = vmatpush1.xpose.msra.mxu0 0.0
        %1657 = vmatprep.subr.mxu0 0.0
        %1658 = vmatpush1.xpose.msra.mxu0 0.0
        %1659 = vmatprep.subr.mxu0 0.0
        %1660 = vmatpush1.xpose.msra.mxu0 0.0
        %1661 = vmatprep.subr.mxu0 0.0
        %1662 = vmatpush1.xpose.msra.mxu0 0.0
        %1663 = vmatprep.subr.mxu0 0.0
        %1664 = vmatpush1.xpose.msra.mxu0 0.0
        %1665 = vmatprep.subr.mxu0 0.0
        %1666 = vmatpush1.xpose.msra.mxu0 0.0
        %1667 = vmatprep.subr.mxu0 0.0
        %1668 = vmatpush1.xpose.msra.mxu0 0.0
        %1669 = vmatprep.subr.mxu0 0.0
        %1670 = vmatpush1.xpose.msra.mxu0 0.0
        %1671 = vmatprep.subr.mxu0 0.0
        %1672 = vmatpush1.xpose.msra.mxu0 0.0
        %1673 = vmatprep.subr.mxu0 0.0
        %1674 = vmatpush1.xpose.msra.mxu0 0.0
        %1675 = vmatprep.subr.mxu0 0.0
        %1676 = vmatpush1.xpose.msra.mxu0 0.0
        %1677 = vmatprep.subr.mxu0 0.0
        %1678 = vmatpush1.xpose.msra.mxu0 0.0
        %1679 = vmatprep.subr.mxu0 0.0
        %1680 = vmatpush1.xpose.msra.mxu0 0.0
        %1681 = vmatprep.subr.mxu0 0.0
        %1682 = vmatpush1.xpose.msra.mxu0 0.0
        %1683 = vmatprep.subr.mxu0 0.0
        %1684 = vmatpush1.xpose.msra.mxu0 0.0
        %1685 = vmatprep.subr.mxu0 0.0
        %1686 = vmatpush1.xpose.msra.mxu0 0.0
        %1687 = vmatprep.subr.mxu0 0.0
        %1688 = vmatpush1.xpose.msra.mxu0 0.0
        %1689 = vmatprep.subr.mxu0 0.0
        %1690 = vmatpush1.xpose.msra.mxu0 0.0
        %1691 = vmatprep.subr.mxu0 0.0
        %1692 = vmatpush1.xpose.msra.mxu0 0.0
        %1693 = vmatprep.subr.mxu0 0.0
        %1694 = vmatpush1.xpose.msra.mxu0 0.0
        %1695 = vmatprep.subr.mxu0 0.0
        %1696 = vmatpush1.xpose.msra.mxu0 0.0
        %1697 = vmatprep.subr.mxu0 0.0
        %1698 = vmatpush1.xpose.msra.mxu0 0.0
        %1699 = vmatprep.subr.mxu0 0.0
        %1700 = vmatpush1.xpose.msra.mxu0 0.0
        %1701 = vmatprep.subr.mxu0 0.0
        %1702 = vmatpush1.xpose.msra.mxu0 0.0
        %1703 = vmatprep.subr.mxu0 0.0
        %1704 = vmatpush1.xpose.msra.mxu0 0.0
        %1705 = vmatprep.subr.mxu0 0.0
        %1706 = vmatpush1.xpose.msra.mxu0 0.0
        %1707 = vmatprep.subr.mxu0 0.0
        %1708 = vmatpush1.xpose.msra.mxu0 0.0
        %1709 = vmatprep.subr.mxu0 0.0
        %1710 = vmatpush1.xpose.msra.mxu0 0.0
        %1711 = vmatprep.subr.mxu0 0.0
        %1712 = vmatpush1.xpose.msra.mxu0 0.0
        %1713 = vmatprep.mubr.f32.mxu0 0.0
        %1714 = vmatmul.mubr.f32.gmra.mrb[0].mxu0 %v1645
        %v1715 = vpop.f32.mrb[0].mxu0
        %v1716 = vadd.f32 0.0, %v1715
        %v1717 = vpop.f32.mrb[0].mxu0
        %1718 = vdwg.mxu0
        %1719 = vrot.lane.b32.xlu0 %v820, 112
        %v1720 = vpop.permute.xlu0 %1719
        %1721 = vrot.lane.b32.xlu0 %v820, 80
        %v1722 = vpop.permute.xlu0 %1721
        %v1723 = vsel %vm826, %v1720, 0
        %v1725 = vsel %vm826, %v1722, 0
        %1727 = vmatprep.subr.mxu0 0.0
        %1728 = vmatpush1.xpose.msra.mxu0 %v1725
        %1729 = vmatprep.subr.mxu0 0.0
        %1730 = vmatpush1.xpose.msra.mxu0 0.0
        %1731 = vmatprep.subr.mxu0 0.0
        %1732 = vmatpush1.xpose.msra.mxu0 0.0
        %1733 = vmatprep.subr.mxu0 0.0
        %1734 = vmatpush1.xpose.msra.mxu0 0.0
        %1735 = vmatprep.subr.mxu0 0.0
        %1736 = vmatpush1.xpose.msra.mxu0 0.0
        %1737 = vmatprep.subr.mxu0 0.0
        %1738 = vmatpush1.xpose.msra.mxu0 0.0
        %1739 = vmatprep.subr.mxu0 0.0
        %1740 = vmatpush1.xpose.msra.mxu0 0.0
        %1741 = vmatprep.subr.mxu0 0.0
        %1742 = vmatpush1.xpose.msra.mxu0 0.0
        %1743 = vmatprep.subr.mxu0 0.0
        %1744 = vmatpush1.xpose.msra.mxu0 0.0
        %1745 = vmatprep.subr.mxu0 0.0
        %1746 = vmatpush1.xpose.msra.mxu0 0.0
        %1747 = vmatprep.subr.mxu0 0.0
        %1748 = vmatpush1.xpose.msra.mxu0 0.0
        %1749 = vmatprep.subr.mxu0 0.0
        %1750 = vmatpush1.xpose.msra.mxu0 0.0
        %1751 = vmatprep.subr.mxu0 0.0
        %1752 = vmatpush1.xpose.msra.mxu0 0.0
        %1753 = vmatprep.subr.mxu0 0.0
        %1754 = vmatpush1.xpose.msra.mxu0 0.0
        %1755 = vmatprep.subr.mxu0 0.0
        %1756 = vmatpush1.xpose.msra.mxu0 0.0
        %1757 = vmatprep.subr.mxu0 0.0
        %1758 = vmatpush1.xpose.msra.mxu0 0.0
        %1759 = vmatprep.subr.mxu0 0.0
        %1760 = vmatpush1.xpose.msra.mxu0 0.0
        %1761 = vmatprep.subr.mxu0 0.0
        %1762 = vmatpush1.xpose.msra.mxu0 0.0
        %1763 = vmatprep.subr.mxu0 0.0
        %1764 = vmatpush1.xpose.msra.mxu0 0.0
        %1765 = vmatprep.subr.mxu0 0.0
        %1766 = vmatpush1.xpose.msra.mxu0 0.0
        %1767 = vmatprep.subr.mxu0 0.0
        %1768 = vmatpush1.xpose.msra.mxu0 0.0
        %1769 = vmatprep.subr.mxu0 0.0
        %1770 = vmatpush1.xpose.msra.mxu0 0.0
        %1771 = vmatprep.subr.mxu0 0.0
        %1772 = vmatpush1.xpose.msra.mxu0 0.0
        %1773 = vmatprep.subr.mxu0 0.0
        %1774 = vmatpush1.xpose.msra.mxu0 0.0
        %1775 = vmatprep.subr.mxu0 0.0
        %1776 = vmatpush1.xpose.msra.mxu0 0.0
        %1777 = vmatprep.subr.mxu0 0.0
        %1778 = vmatpush1.xpose.msra.mxu0 0.0
        %1779 = vmatprep.subr.mxu0 0.0
        %1780 = vmatpush1.xpose.msra.mxu0 0.0
        %1781 = vmatprep.subr.mxu0 0.0
        %1782 = vmatpush1.xpose.msra.mxu0 0.0
        %1783 = vmatprep.subr.mxu0 0.0
        %1784 = vmatpush1.xpose.msra.mxu0 0.0
        %1785 = vmatprep.subr.mxu0 0.0
        %1786 = vmatpush1.xpose.msra.mxu0 0.0
        %1787 = vmatprep.subr.mxu0 0.0
        %1788 = vmatpush1.xpose.msra.mxu0 0.0
        %1789 = vmatprep.subr.mxu0 0.0
        %1790 = vmatpush1.xpose.msra.mxu0 0.0
        %1791 = vmatprep.mubr.f32.mxu0 0.0
        %1792 = vmatmul.mubr.f32.gmra.mrb[0].mxu0 %v1723
        %v1793 = vpop.f32.mrb[0].mxu0
        %v1794 = vadd.f32 0.0, %v1793
        %v1795 = vpop.f32.mrb[0].mxu0
        %1796 = vdwg.mxu0
        %v1797 = vmul.f32 %v1560, 0.25
        %v1798 = vmul.f32 %v1638, 0.25
        %v1799 = vmul.f32 %v1716, 0.25
        %v1800 = vmul.f32 %v1794, 0.25
        %v1801 = vsel %vm1136, %v1797, -inf
        %1802 = vmax.xlane.f32.xlu0 %v1801
        %v1803 = vpop.xlane.xlu0 %1802
        %v1804 = vsel %vm1136, %v1798, -inf
        %1805 = vmax.xlane.f32.xlu0 %v1804
        %v1806 = vpop.xlane.xlu0 %1805
        %v1807 = vsel %vm1136, %v1799, -inf
        %1808 = vmax.xlane.f32.xlu0 %v1807
        %v1809 = vpop.xlane.xlu0 %1808
        %v1810 = vsel %vm1136, %v1800, -inf
        %1811 = vmax.xlane.f32.xlu0 %v1810
        %v1812 = vpop.xlane.xlu0 %1811
        %v1813 = vsub.f32 %v1797, %v1803
        %v1814 = vsub.f32 %v1798, %v1806
        %v1815 = vsub.f32 %v1799, %v1809
        %v1816 = vsub.f32 %v1800, %v1812
        %v1817 = vmul.f32 %v1813, 1.442695
        %v1818 = vpow.pop %v1817
        %v1819 = vmul.f32 %v1814, 1.442695
        %v1820 = vpow.pop %v1819
        %v1821 = vmul.f32 %v1815, 1.442695
        %v1822 = vpow.pop %v1821
        %v1823 = vmul.f32 %v1816, 1.442695
        %v1824 = vpow.pop %v1823
        %v1825 = vsel %vm1136, %v1818, 0.0
        %1826 = vadd.xlane.f32.xlu0 %v1825
        %v1827 = vpop.xlane.xlu0 %1826
        %v1828 = vsel %vm1136, %v1820, 0.0
        %1829 = vadd.xlane.f32.xlu0 %v1828
        %v1830 = vpop.xlane.xlu0 %1829
        %v1831 = vsel %vm1136, %v1822, 0.0
        %1832 = vadd.xlane.f32.xlu0 %v1831
        %v1833 = vpop.xlane.xlu0 %1832
        %v1834 = vsel %vm1136, %v1824, 0.0
        %1835 = vadd.xlane.f32.xlu0 %v1834
        %v1836 = vpop.xlane.xlu0 %1835
        %v1837 = vrcp.pop %v1827
        %v1838 = vrcp.pop %v1830
        %v1839 = vrcp.pop %v1833
        %v1840 = vrcp.pop %v1836
        %v1841 = vmul.f32 %v1818, %v1837
        %v1842 = vmul.f32 %v1820, %v1838
        %v1843 = vmul.f32 %v1822, %v1839
        %v1844 = vmul.f32 %v1824, %v1840
        %1845 = vrot.lane.b32.xlu0 %v805, 48
        %v1846 = vpop.permute.xlu0 %1845
        %v1849 = vsel %vm1136, %v1841, 0
        %1851 = vmatprep.subr.mxu0 0.0
        %1852 = vmatpush1.msra.mxu0 %v1846
        %1853 = vmatprep.subr.mxu0 0.0
        %1854 = vmatpush1.msra.mxu0 0.0
        %1855 = vmatprep.subr.mxu0 0.0
        %1856 = vmatpush1.msra.mxu0 0.0
        %1857 = vmatprep.subr.mxu0 0.0
        %1858 = vmatpush1.msra.mxu0 0.0
        %1859 = vmatprep.subr.mxu0 0.0
        %1860 = vmatpush1.msra.mxu0 0.0
        %1861 = vmatprep.subr.mxu0 0.0
        %1862 = vmatpush1.msra.mxu0 0.0
        %1863 = vmatprep.subr.mxu0 0.0
        %1864 = vmatpush1.msra.mxu0 0.0
        %1865 = vmatprep.subr.mxu0 0.0
        %1866 = vmatpush1.msra.mxu0 0.0
        %1867 = vmatprep.subr.mxu0 0.0
        %1868 = vmatpush1.msra.mxu0 0.0
        %1869 = vmatprep.subr.mxu0 0.0
        %1870 = vmatpush1.msra.mxu0 0.0
        %1871 = vmatprep.subr.mxu0 0.0
        %1872 = vmatpush1.msra.mxu0 0.0
        %1873 = vmatprep.subr.mxu0 0.0
        %1874 = vmatpush1.msra.mxu0 0.0
        %1875 = vmatprep.subr.mxu0 0.0
        %1876 = vmatpush1.msra.mxu0 0.0
        %1877 = vmatprep.subr.mxu0 0.0
        %1878 = vmatpush1.msra.mxu0 0.0
        %1879 = vmatprep.subr.mxu0 0.0
        %1880 = vmatpush1.msra.mxu0 0.0
        %1881 = vmatprep.subr.mxu0 0.0
        %1882 = vmatpush1.msra.mxu0 0.0
        %1883 = vmatprep.subr.mxu0 0.0
        %1884 = vmatpush1.msra.mxu0 0.0
        %1885 = vmatprep.subr.mxu0 0.0
        %1886 = vmatpush1.msra.mxu0 0.0
        %1887 = vmatprep.subr.mxu0 0.0
        %1888 = vmatpush1.msra.mxu0 0.0
        %1889 = vmatprep.subr.mxu0 0.0
        %1890 = vmatpush1.msra.mxu0 0.0
        %1891 = vmatprep.subr.mxu0 0.0
        %1892 = vmatpush1.msra.mxu0 0.0
        %1893 = vmatprep.subr.mxu0 0.0
        %1894 = vmatpush1.msra.mxu0 0.0
        %1895 = vmatprep.subr.mxu0 0.0
        %1896 = vmatpush1.msra.mxu0 0.0
        %1897 = vmatprep.subr.mxu0 0.0
        %1898 = vmatpush1.msra.mxu0 0.0
        %1899 = vmatprep.subr.mxu0 0.0
        %1900 = vmatpush1.msra.mxu0 0.0
        %1901 = vmatprep.subr.mxu0 0.0
        %1902 = vmatpush1.msra.mxu0 0.0
        %1903 = vmatprep.subr.mxu0 0.0
        %1904 = vmatpush1.msra.mxu0 0.0
        %1905 = vmatprep.subr.mxu0 0.0
        %1906 = vmatpush1.msra.mxu0 0.0
        %1907 = vmatprep.subr.mxu0 0.0
        %1908 = vmatpush1.msra.mxu0 0.0
        %1909 = vmatprep.subr.mxu0 0.0
        %1910 = vmatpush1.msra.mxu0 0.0
        %1911 = vmatprep.subr.mxu0 0.0
        %1912 = vmatpush1.msra.mxu0 0.0
        %1913 = vmatprep.subr.mxu0 0.0
        %1914 = vmatpush1.msra.mxu0 0.0
        %1915 = vmatprep.mubr.f32.mxu0 0.0
        %1916 = vmatmul.mubr.f32.gmra.mrb[0].mxu0 %v1849
        %v1917 = vpop.f32.mrb[0].mxu0
        %v1918 = vadd.f32 0.0, %v1917
        %v1919 = vpop.f32.mrb[0].mxu0
        %1920 = vdwg.mxu0
        %1921 = vrot.lane.b32.xlu0 %v810, 48
        %v1922 = vpop.permute.xlu0 %1921
        %v1925 = vsel %vm1136, %v1842, 0
        %1927 = vmatprep.subr.mxu0 0.0
        %1928 = vmatpush1.msra.mxu0 %v1922
        %1929 = vmatprep.subr.mxu0 0.0
        %1930 = vmatpush1.msra.mxu0 0.0
        %1931 = vmatprep.subr.mxu0 0.0
        %1932 = vmatpush1.msra.mxu0 0.0
        %1933 = vmatprep.subr.mxu0 0.0
        %1934 = vmatpush1.msra.mxu0 0.0
        %1935 = vmatprep.subr.mxu0 0.0
        %1936 = vmatpush1.msra.mxu0 0.0
        %1937 = vmatprep.subr.mxu0 0.0
        %1938 = vmatpush1.msra.mxu0 0.0
        %1939 = vmatprep.subr.mxu0 0.0
        %1940 = vmatpush1.msra.mxu0 0.0
        %1941 = vmatprep.subr.mxu0 0.0
        %1942 = vmatpush1.msra.mxu0 0.0
        %1943 = vmatprep.subr.mxu0 0.0
        %1944 = vmatpush1.msra.mxu0 0.0
        %1945 = vmatprep.subr.mxu0 0.0
        %1946 = vmatpush1.msra.mxu0 0.0
        %1947 = vmatprep.subr.mxu0 0.0
        %1948 = vmatpush1.msra.mxu0 0.0
        %1949 = vmatprep.subr.mxu0 0.0
        %1950 = vmatpush1.msra.mxu0 0.0
        %1951 = vmatprep.subr.mxu0 0.0
        %1952 = vmatpush1.msra.mxu0 0.0
        %1953 = vmatprep.subr.mxu0 0.0
        %1954 = vmatpush1.msra.mxu0 0.0
        %1955 = vmatprep.subr.mxu0 0.0
        %1956 = vmatpush1.msra.mxu0 0.0
        %1957 = vmatprep.subr.mxu0 0.0
        %1958 = vmatpush1.msra.mxu0 0.0
        %1959 = vmatprep.subr.mxu0 0.0
        %1960 = vmatpush1.msra.mxu0 0.0
        %1961 = vmatprep.subr.mxu0 0.0
        %1962 = vmatpush1.msra.mxu0 0.0
        %1963 = vmatprep.subr.mxu0 0.0
        %1964 = vmatpush1.msra.mxu0 0.0
        %1965 = vmatprep.subr.mxu0 0.0
        %1966 = vmatpush1.msra.mxu0 0.0
        %1967 = vmatprep.subr.mxu0 0.0
        %1968 = vmatpush1.msra.mxu0 0.0
        %1969 = vmatprep.subr.mxu0 0.0
        %1970 = vmatpush1.msra.mxu0 0.0
        %1971 = vmatprep.subr.mxu0 0.0
        %1972 = vmatpush1.msra.mxu0 0.0
        %1973 = vmatprep.subr.mxu0 0.0
        %1974 = vmatpush1.msra.mxu0 0.0
        %1975 = vmatprep.subr.mxu0 0.0
        %1976 = vmatpush1.msra.mxu0 0.0
        %1977 = vmatprep.subr.mxu0 0.0
        %1978 = vmatpush1.msra.mxu0 0.0
        %1979 = vmatprep.subr.mxu0 0.0
        %1980 = vmatpush1.msra.mxu0 0.0
        %1981 = vmatprep.subr.mxu0 0.0
        %1982 = vmatpush1.msra.mxu0 0.0
        %1983 = vmatprep.subr.mxu0 0.0
        %1984 = vmatpush1.msra.mxu0 0.0
        %1985 = vmatprep.subr.mxu0 0.0
        %1986 = vmatpush1.msra.mxu0 0.0
        %1987 = vmatprep.subr.mxu0 0.0
        %1988 = vmatpush1.msra.mxu0 0.0
        %1989 = vmatprep.subr.mxu0 0.0
        %1990 = vmatpush1.msra.mxu0 0.0
        %1991 = vmatprep.mubr.f32.mxu0 0.0
        %1992 = vmatmul.mubr.f32.gmra.mrb[0].mxu0 %v1925
        %v1993 = vpop.f32.mrb[0].mxu0
        %v1994 = vadd.f32 0.0, %v1993
        %v1995 = vpop.f32.mrb[0].mxu0
        %1996 = vdwg.mxu0
        %1997 = vrot.lane.b32.xlu0 %v815, 48
        %v1998 = vpop.permute.xlu0 %1997
        %v2001 = vsel %vm1136, %v1843, 0
        %2003 = vmatprep.subr.mxu0 0.0
        %2004 = vmatpush1.msra.mxu0 %v1998
        %2005 = vmatprep.subr.mxu0 0.0
        %2006 = vmatpush1.msra.mxu0 0.0
        %2007 = vmatprep.subr.mxu0 0.0
        %2008 = vmatpush1.msra.mxu0 0.0
        %2009 = vmatprep.subr.mxu0 0.0
        %2010 = vmatpush1.msra.mxu0 0.0
        %2011 = vmatprep.subr.mxu0 0.0
        %2012 = vmatpush1.msra.mxu0 0.0
        %2013 = vmatprep.subr.mxu0 0.0
        %2014 = vmatpush1.msra.mxu0 0.0
        %2015 = vmatprep.subr.mxu0 0.0
        %2016 = vmatpush1.msra.mxu0 0.0
        %2017 = vmatprep.subr.mxu0 0.0
        %2018 = vmatpush1.msra.mxu0 0.0
        %2019 = vmatprep.subr.mxu0 0.0
        %2020 = vmatpush1.msra.mxu0 0.0
        %2021 = vmatprep.subr.mxu0 0.0
        %2022 = vmatpush1.msra.mxu0 0.0
        %2023 = vmatprep.subr.mxu0 0.0
        %2024 = vmatpush1.msra.mxu0 0.0
        %2025 = vmatprep.subr.mxu0 0.0
        %2026 = vmatpush1.msra.mxu0 0.0
        %2027 = vmatprep.subr.mxu0 0.0
        %2028 = vmatpush1.msra.mxu0 0.0
        %2029 = vmatprep.subr.mxu0 0.0
        %2030 = vmatpush1.msra.mxu0 0.0
        %2031 = vmatprep.subr.mxu0 0.0
        %2032 = vmatpush1.msra.mxu0 0.0
        %2033 = vmatprep.subr.mxu0 0.0
        %2034 = vmatpush1.msra.mxu0 0.0
        %2035 = vmatprep.subr.mxu0 0.0
        %2036 = vmatpush1.msra.mxu0 0.0
        %2037 = vmatprep.subr.mxu0 0.0
        %2038 = vmatpush1.msra.mxu0 0.0
        %2039 = vmatprep.subr.mxu0 0.0
        %2040 = vmatpush1.msra.mxu0 0.0
        %2041 = vmatprep.subr.mxu0 0.0
        %2042 = vmatpush1.msra.mxu0 0.0
        %2043 = vmatprep.subr.mxu0 0.0
        %2044 = vmatpush1.msra.mxu0 0.0
        %2045 = vmatprep.subr.mxu0 0.0
        %2046 = vmatpush1.msra.mxu0 0.0
        %2047 = vmatprep.subr.mxu0 0.0
        %2048 = vmatpush1.msra.mxu0 0.0
        %2049 = vmatprep.subr.mxu0 0.0
        %2050 = vmatpush1.msra.mxu0 0.0
        %2051 = vmatprep.subr.mxu0 0.0
        %2052 = vmatpush1.msra.mxu0 0.0
        %2053 = vmatprep.subr.mxu0 0.0
        %2054 = vmatpush1.msra.mxu0 0.0
        %2055 = vmatprep.subr.mxu0 0.0
        %2056 = vmatpush1.msra.mxu0 0.0
        %2057 = vmatprep.subr.mxu0 0.0
        %2058 = vmatpush1.msra.mxu0 0.0
        %2059 = vmatprep.subr.mxu0 0.0
        %2060 = vmatpush1.msra.mxu0 0.0
        %2061 = vmatprep.subr.mxu0 0.0
        %2062 = vmatpush1.msra.mxu0 0.0
        %2063 = vmatprep.subr.mxu0 0.0
        %2064 = vmatpush1.msra.mxu0 0.0
        %2065 = vmatprep.subr.mxu0 0.0
        %2066 = vmatpush1.msra.mxu0 0.0
        %2067 = vmatprep.mubr.f32.mxu0 0.0
        %2068 = vmatmul.mubr.f32.gmra.mrb[0].mxu0 %v2001
        %v2069 = vpop.f32.mrb[0].mxu0
        %v2070 = vadd.f32 0.0, %v2069
        %v2071 = vpop.f32.mrb[0].mxu0
        %2072 = vdwg.mxu0
        %2073 = vrot.lane.b32.xlu0 %v820, 48
        %v2074 = vpop.permute.xlu0 %2073
        %v2077 = vsel %vm1136, %v1844, 0
        %2079 = vmatprep.subr.mxu0 0.0
        %2080 = vmatpush1.msra.mxu0 %v2074
        %2081 = vmatprep.subr.mxu0 0.0
        %2082 = vmatpush1.msra.mxu0 0.0
        %2083 = vmatprep.subr.mxu0 0.0
        %2084 = vmatpush1.msra.mxu0 0.0
        %2085 = vmatprep.subr.mxu0 0.0
        %2086 = vmatpush1.msra.mxu0 0.0
        %2087 = vmatprep.subr.mxu0 0.0
        %2088 = vmatpush1.msra.mxu0 0.0
        %2089 = vmatprep.subr.mxu0 0.0
        %2090 = vmatpush1.msra.mxu0 0.0
        %2091 = vmatprep.subr.mxu0 0.0
        %2092 = vmatpush1.msra.mxu0 0.0
        %2093 = vmatprep.subr.mxu0 0.0
        %2094 = vmatpush1.msra.mxu0 0.0
        %2095 = vmatprep.subr.mxu0 0.0
        %2096 = vmatpush1.msra.mxu0 0.0
        %2097 = vmatprep.subr.mxu0 0.0
        %2098 = vmatpush1.msra.mxu0 0.0
        %2099 = vmatprep.subr.mxu0 0.0
        %2100 = vmatpush1.msra.mxu0 0.0
        %2101 = vmatprep.subr.mxu0 0.0
        %2102 = vmatpush1.msra.mxu0 0.0
        %2103 = vmatprep.subr.mxu0 0.0
        %2104 = vmatpush1.msra.mxu0 0.0
        %2105 = vmatprep.subr.mxu0 0.0
        %2106 = vmatpush1.msra.mxu0 0.0
        %2107 = vmatprep.subr.mxu0 0.0
        %2108 = vmatpush1.msra.mxu0 0.0
        %2109 = vmatprep.subr.mxu0 0.0
        %2110 = vmatpush1.msra.mxu0 0.0
        %2111 = vmatprep.subr.mxu0 0.0
        %2112 = vmatpush1.msra.mxu0 0.0
        %2113 = vmatprep.subr.mxu0 0.0
        %2114 = vmatpush1.msra.mxu0 0.0
        %2115 = vmatprep.subr.mxu0 0.0
        %2116 = vmatpush1.msra.mxu0 0.0
        %2117 = vmatprep.subr.mxu0 0.0
        %2118 = vmatpush1.msra.mxu0 0.0
        %2119 = vmatprep.subr.mxu0 0.0
        %2120 = vmatpush1.msra.mxu0 0.0
        %2121 = vmatprep.subr.mxu0 0.0
        %2122 = vmatpush1.msra.mxu0 0.0
        %2123 = vmatprep.subr.mxu0 0.0
        %2124 = vmatpush1.msra.mxu0 0.0
        %2125 = vmatprep.subr.mxu0 0.0
        %2126 = vmatpush1.msra.mxu0 0.0
        %2127 = vmatprep.subr.mxu0 0.0
        %2128 = vmatpush1.msra.mxu0 0.0
        %2129 = vmatprep.subr.mxu0 0.0
        %2130 = vmatpush1.msra.mxu0 0.0
        %2131 = vmatprep.subr.mxu0 0.0
        %2132 = vmatpush1.msra.mxu0 0.0
        %2133 = vmatprep.subr.mxu0 0.0
        %2134 = vmatpush1.msra.mxu0 0.0
        %2135 = vmatprep.subr.mxu0 0.0
        %2136 = vmatpush1.msra.mxu0 0.0
        %2137 = vmatprep.subr.mxu0 0.0
        %2138 = vmatpush1.msra.mxu0 0.0
        %2139 = vmatprep.subr.mxu0 0.0
        %2140 = vmatpush1.msra.mxu0 0.0
        %2141 = vmatprep.subr.mxu0 0.0
        %2142 = vmatpush1.msra.mxu0 0.0
        %2143 = vmatprep.mubr.f32.mxu0 0.0
        %2144 = vmatmul.mubr.f32.gmra.mrb[0].mxu0 %v2077
        %v2145 = vpop.f32.mrb[0].mxu0
        %v2146 = vadd.f32 0.0, %v2145
        %v2147 = vpop.f32.mrb[0].mxu0
        %2148 = vdwg.mxu0
        %v2150 = vsel %vm826, %v1918, 0
        %v2153 = vsel %vm826, %v1994, 0
        %v2156 = vsel %vm826, %v2070, 0
        %v2159 = vsel %vm826, %v2146, 0
        %2161 = vmatprep.subr.mxu0 0.0
        %2162 = vmatpush1.msra.mxu0 %v724
        %2163 = vmatprep.subr.mxu0 0.0
        %2164 = vmatpush1.msra.mxu0 %v725
        %2165 = vmatprep.subr.mxu0 0.0
        %2166 = vmatpush1.msra.mxu0 0.0
        %2167 = vmatprep.subr.mxu0 0.0
        %2168 = vmatpush1.msra.mxu0 0.0
        %2169 = vmatprep.subr.mxu0 0.0
        %2170 = vmatpush1.msra.mxu0 0.0
        %2171 = vmatprep.subr.mxu0 0.0
        %2172 = vmatpush1.msra.mxu0 0.0
        %2173 = vmatprep.subr.mxu0 0.0
        %2174 = vmatpush1.msra.mxu0 0.0
        %2175 = vmatprep.subr.mxu0 0.0
        %2176 = vmatpush1.msra.mxu0 0.0
        %2177 = vmatprep.subr.mxu0 0.0
        %2178 = vmatpush1.msra.mxu0 0.0
        %2179 = vmatprep.subr.mxu0 0.0
        %2180 = vmatpush1.msra.mxu0 0.0
        %2181 = vmatprep.subr.mxu0 0.0
        %2182 = vmatpush1.msra.mxu0 0.0
        %2183 = vmatprep.subr.mxu0 0.0
        %2184 = vmatpush1.msra.mxu0 0.0
        %2185 = vmatprep.subr.mxu0 0.0
        %2186 = vmatpush1.msra.mxu0 0.0
        %2187 = vmatprep.subr.mxu0 0.0
        %2188 = vmatpush1.msra.mxu0 0.0
        %2189 = vmatprep.subr.mxu0 0.0
        %2190 = vmatpush1.msra.mxu0 0.0
        %2191 = vmatprep.subr.mxu0 0.0
        %2192 = vmatpush1.msra.mxu0 0.0
        %2193 = vmatprep.subr.mxu0 0.0
        %2194 = vmatpush1.msra.mxu0 0.0
        %2195 = vmatprep.subr.mxu0 0.0
        %2196 = vmatpush1.msra.mxu0 0.0
        %2197 = vmatprep.subr.mxu0 0.0
        %2198 = vmatpush1.msra.mxu0 0.0
        %2199 = vmatprep.subr.mxu0 0.0
        %2200 = vmatpush1.msra.mxu0 0.0
        %2201 = vmatprep.subr.mxu0 0.0
        %2202 = vmatpush1.msra.mxu0 0.0
        %2203 = vmatprep.subr.mxu0 0.0
        %2204 = vmatpush1.msra.mxu0 0.0
        %2205 = vmatprep.subr.mxu0 0.0
        %2206 = vmatpush1.msra.mxu0 0.0
        %2207 = vmatprep.subr.mxu0 0.0
        %2208 = vmatpush1.msra.mxu0 0.0
        %2209 = vmatprep.subr.mxu0 0.0
        %2210 = vmatpush1.msra.mxu0 0.0
        %2211 = vmatprep.subr.mxu0 0.0
        %2212 = vmatpush1.msra.mxu0 0.0
        %2213 = vmatprep.subr.mxu0 0.0
        %2214 = vmatpush1.msra.mxu0 0.0
        %2215 = vmatprep.subr.mxu0 0.0
        %2216 = vmatpush1.msra.mxu0 0.0
        %2217 = vmatprep.subr.mxu0 0.0
        %2218 = vmatpush1.msra.mxu0 0.0
        %2219 = vmatprep.subr.mxu0 0.0
        %2220 = vmatpush1.msra.mxu0 0.0
        %2221 = vmatprep.subr.mxu0 0.0
        %2222 = vmatpush1.msra.mxu0 0.0
        %2223 = vmatprep.subr.mxu0 0.0
        %2224 = vmatpush1.msra.mxu0 0.0
        %2225 = vmatprep.mubr.f32.mxu0 0.0
        %2226 = vmatmul.mubr.f32.gmra.mrb[0].mxu0 %v2150
        %v2227 = vpop.f32.mrb[0].mxu0
        %v2228 = vadd.f32 0.0, %v2227
        %v2229 = vpop.f32.mrb[0].mxu0
        %2230 = vmatprep.mubr.f32.mxu0 0.0
        %2231 = vmatmul.mubr.f32.gmra.mrb[0].mxu0 %v2153
        %v2232 = vpop.f32.mrb[0].mxu0
        %v2233 = vadd.f32 0.0, %v2232
        %v2234 = vpop.f32.mrb[0].mxu0
        %2235 = vmatprep.mubr.f32.mxu0 0.0
        %2236 = vmatmul.mubr.f32.gmra.mrb[0].mxu0 %v2156
        %v2237 = vpop.f32.mrb[0].mxu0
        %v2238 = vadd.f32 0.0, %v2237
        %v2239 = vpop.f32.mrb[0].mxu0
        %2240 = vmatprep.mubr.f32.mxu0 0.0
        %2241 = vmatmul.mubr.f32.gmra.mrb[0].mxu0 %v2159
        %v2242 = vpop.f32.mrb[0].mxu0
        %v2243 = vadd.f32 0.0, %v2242
        %v2244 = vpop.f32.mrb[0].mxu0
        %2245 = vdwg.mxu0
        %v2247 = vsel %vm826, %v1254, 0
        %v2250 = vsel %vm826, %v1330, 0
        %v2253 = vsel %vm826, %v1406, 0
        %v2256 = vsel %vm826, %v1482, 0
        %2258 = vmatprep.subr.mxu0 0.0
        %2259 = vmatpush1.msra.mxu0 %v722
        %2260 = vmatprep.subr.mxu0 0.0
        %2261 = vmatpush1.msra.mxu0 %v723
        %2262 = vmatprep.subr.mxu0 0.0
        %2263 = vmatpush1.msra.mxu0 0.0
        %2264 = vmatprep.subr.mxu0 0.0
        %2265 = vmatpush1.msra.mxu0 0.0
        %2266 = vmatprep.subr.mxu0 0.0
        %2267 = vmatpush1.msra.mxu0 0.0
        %2268 = vmatprep.subr.mxu0 0.0
        %2269 = vmatpush1.msra.mxu0 0.0
        %2270 = vmatprep.subr.mxu0 0.0
        %2271 = vmatpush1.msra.mxu0 0.0
        %2272 = vmatprep.subr.mxu0 0.0
        %2273 = vmatpush1.msra.mxu0 0.0
        %2274 = vmatprep.subr.mxu0 0.0
        %2275 = vmatpush1.msra.mxu0 0.0
        %2276 = vmatprep.subr.mxu0 0.0
        %2277 = vmatpush1.msra.mxu0 0.0
        %2278 = vmatprep.subr.mxu0 0.0
        %2279 = vmatpush1.msra.mxu0 0.0
        %2280 = vmatprep.subr.mxu0 0.0
        %2281 = vmatpush1.msra.mxu0 0.0
        %2282 = vmatprep.subr.mxu0 0.0
        %2283 = vmatpush1.msra.mxu0 0.0
        %2284 = vmatprep.subr.mxu0 0.0
        %2285 = vmatpush1.msra.mxu0 0.0
        %2286 = vmatprep.subr.mxu0 0.0
        %2287 = vmatpush1.msra.mxu0 0.0
        %2288 = vmatprep.subr.mxu0 0.0
        %2289 = vmatpush1.msra.mxu0 0.0
        %2290 = vmatprep.subr.mxu0 0.0
        %2291 = vmatpush1.msra.mxu0 0.0
        %2292 = vmatprep.subr.mxu0 0.0
        %2293 = vmatpush1.msra.mxu0 0.0
        %2294 = vmatprep.subr.mxu0 0.0
        %2295 = vmatpush1.msra.mxu0 0.0
        %2296 = vmatprep.subr.mxu0 0.0
        %2297 = vmatpush1.msra.mxu0 0.0
        %2298 = vmatprep.subr.mxu0 0.0
        %2299 = vmatpush1.msra.mxu0 0.0
        %2300 = vmatprep.subr.mxu0 0.0
        %2301 = vmatpush1.msra.mxu0 0.0
        %2302 = vmatprep.subr.mxu0 0.0
        %2303 = vmatpush1.msra.mxu0 0.0
        %2304 = vmatprep.subr.mxu0 0.0
        %2305 = vmatpush1.msra.mxu0 0.0
        %2306 = vmatprep.subr.mxu0 0.0
        %2307 = vmatpush1.msra.mxu0 0.0
        %2308 = vmatprep.subr.mxu0 0.0
        %2309 = vmatpush1.msra.mxu0 0.0
        %2310 = vmatprep.subr.mxu0 0.0
        %2311 = vmatpush1.msra.mxu0 0.0
        %2312 = vmatprep.subr.mxu0 0.0
        %2313 = vmatpush1.msra.mxu0 0.0
        %2314 = vmatprep.subr.mxu0 0.0
        %2315 = vmatpush1.msra.mxu0 0.0
        %2316 = vmatprep.subr.mxu0 0.0
        %2317 = vmatpush1.msra.mxu0 0.0
        %2318 = vmatprep.subr.mxu0 0.0
        %2319 = vmatpush1.msra.mxu0 0.0
        %2320 = vmatprep.subr.mxu0 0.0
        %2321 = vmatpush1.msra.mxu0 0.0
        %2322 = vmatprep.mubr.f32.mxu0 0.0
        %2323 = vmatmul.mubr.f32.gmra.mrb[0].mxu0 %v2247
        %v2324 = vpop.f32.mrb[0].mxu0
        %v2325 = vadd.f32 %v2228, %v2324
        %v2326 = vpop.f32.mrb[0].mxu0
        %2327 = vmatprep.mubr.f32.mxu0 0.0
        %2328 = vmatmul.mubr.f32.gmra.mrb[0].mxu0 %v2250
        %v2329 = vpop.f32.mrb[0].mxu0
        %v2330 = vadd.f32 %v2233, %v2329
        %v2331 = vpop.f32.mrb[0].mxu0
        %2332 = vmatprep.mubr.f32.mxu0 0.0
        %2333 = vmatmul.mubr.f32.gmra.mrb[0].mxu0 %v2253
        %v2334 = vpop.f32.mrb[0].mxu0
        %v2335 = vadd.f32 %v2238, %v2334
        %v2336 = vpop.f32.mrb[0].mxu0
        %2337 = vmatprep.mubr.f32.mxu0 0.0
        %2338 = vmatmul.mubr.f32.gmra.mrb[0].mxu0 %v2256
        %v2339 = vpop.f32.mrb[0].mxu0
        %v2340 = vadd.f32 %v2243, %v2339
        %v2341 = vpop.f32.mrb[0].mxu0
        %2342 = vdwg.mxu0
        %v2343 = vld [vmem:[%s606] sm:$0x1]
        %v2345 = vlaneseq
        %v2346 = vshrl.u32 %v2345, 7
        %v2347 = vsub.s32 0, %v2346
        %v2348 = vrot.slane %v2343, %v2347
        %v2350 = vadd.f32 %v2325, %v2348
        %v2351 = vadd.f32 %v2330, %v2348
        %v2352 = vadd.f32 %v2335, %v2348
        %v2353 = vadd.f32 %v2340, %v2348
        %v2354 = vadd.f32 %v638, %v2350
        %v2355 = vadd.f32 %v639, %v2351
        %v2356 = vadd.f32 %v640, %v2352
        %v2357 = vadd.f32 %v641, %v2353
        %v2358 = vld [vmem:[%s609] sm:$0x1]
        %v2359 = vld [vmem:[%s612] sm:$0x1]
        %v2360 = vsel %vm644, %v2354, 0.0
        %2361 = vadd.xlane.f32.xlu0 %v2360
        %v2362 = vpop.xlane.xlu0 %2361
        %v2363 = vsel %vm644, %v2355, 0.0
        %2364 = vadd.xlane.f32.xlu0 %v2363
        %v2365 = vpop.xlane.xlu0 %2364
        %v2366 = vsel %vm644, %v2356, 0.0
        %2367 = vadd.xlane.f32.xlu0 %v2366
        %v2368 = vpop.xlane.xlu0 %2367
        %v2369 = vsel %vm644, %v2357, 0.0
        %2370 = vadd.xlane.f32.xlu0 %v2369
        %v2371 = vpop.xlane.xlu0 %2370
        %v2372 = vmul.f32 %v2362, %v657
        %v2373 = vmul.f32 %v2365, %v657
        %v2374 = vmul.f32 %v2368, %v657
        %v2375 = vmul.f32 %v2371, %v657
        %v2376 = vsub.f32 %v2354, %v2372
        %v2377 = vsub.f32 %v2355, %v2373
        %v2378 = vsub.f32 %v2356, %v2374
        %v2379 = vsub.f32 %v2357, %v2375
        %v2380 = vmul.f32 %v2376, %v2376
        %v2381 = vmul.f32 %v2377, %v2377
        %v2382 = vmul.f32 %v2378, %v2378
        %v2383 = vmul.f32 %v2379, %v2379
        %v2384 = vsel %vm644, %v2380, 0.0
        %2385 = vadd.xlane.f32.xlu0 %v2384
        %v2386 = vpop.xlane.xlu0 %2385
        %v2387 = vsel %vm644, %v2381, 0.0
        %2388 = vadd.xlane.f32.xlu0 %v2387
        %v2389 = vpop.xlane.xlu0 %2388
        %v2390 = vsel %vm644, %v2382, 0.0
        %2391 = vadd.xlane.f32.xlu0 %v2390
        %v2392 = vpop.xlane.xlu0 %2391
        %v2393 = vsel %vm644, %v2383, 0.0
        %2394 = vadd.xlane.f32.xlu0 %v2393
        %v2395 = vpop.xlane.xlu0 %2394
        %v2396 = vmul.f32 %v2386, %v657
        %v2397 = vmul.f32 %v2389, %v657
        %v2398 = vmul.f32 %v2392, %v657
        %v2399 = vmul.f32 %v2395, %v657
        %v2400 = vadd.f32 %v2396, 1e-05
        %v2401 = vadd.f32 %v2397, 1e-05
        %v2402 = vadd.f32 %v2398, 1e-05
        %v2403 = vadd.f32 %v2399, 1e-05
        %v2404 = vrsqrt.pop %v2400
        %v2405 = vrsqrt.pop %v2401
        %v2406 = vrsqrt.pop %v2402
        %v2407 = vrsqrt.pop %v2403
        %v2408 = vmul.f32 %v2376, %v2404
        %v2409 = vmul.f32 %v2377, %v2405
        %v2410 = vmul.f32 %v2378, %v2406
        %v2411 = vmul.f32 %v2379, %v2407
        %v2413 = vlaneseq
        %v2414 = vshrl.u32 %v2413, 7
        %v2415 = vsub.s32 0, %v2414
        %v2416 = vrot.slane %v2358, %v2415
        %v2418 = vmul.f32 %v2408, %v2416
        %v2419 = vmul.f32 %v2409, %v2416
        %v2420 = vmul.f32 %v2410, %v2416
        %v2421 = vmul.f32 %v2411, %v2416
        %v2423 = vlaneseq
        %v2424 = vshrl.u32 %v2423, 7
        %v2425 = vsub.s32 0, %v2424
        %v2426 = vrot.slane %v2359, %v2425
        %v2428 = vadd.f32 %v2418, %v2426
        %v2429 = vadd.f32 %v2419, %v2426
        %v2430 = vadd.f32 %v2420, %v2426
        %v2431 = vadd.f32 %v2421, %v2426
        %v2432 = vld [vmem:[%s500] sm:$0xff]
        %v2433 = vld [vmem:[%s500 + $0x8] sm:$0xff]
        %v2434 = vld [vmem:[%s500 + $0x10] sm:$0xff]
        %v2435 = vld [vmem:[%s500 + $0x18] sm:$0xff]
        %v2436 = vld [vmem:[%s615] sm:$0x1]
        %v2438 = vlaneseq
        %v2439 = vshrl.u32 %v2438, 7
        %v2440 = vsub.s32 0, %v2439
        %v2441 = vrot.slane %v2436, %v2440
        %v2444 = vsel %vm644, %v2428, 0
        %v2447 = vsel %vm644, %v2429, 0
        %v2450 = vsel %vm644, %v2430, 0
        %v2453 = vsel %vm644, %v2431, 0
        %2455 = vmatprep.subr.mxu0 0.0
        %2456 = vmatpush1.msra.mxu0 %v2432
        %2457 = vmatprep.subr.mxu0 0.0
        %2458 = vmatpush1.msra.mxu0 %v2433
        %2459 = vmatprep.subr.mxu0 0.0
        %2460 = vmatpush1.msra.mxu0 %v2434
        %2461 = vmatprep.subr.mxu0 0.0
        %2462 = vmatpush1.msra.mxu0 %v2435
        %2463 = vmatprep.subr.mxu0 0.0
        %2464 = vmatpush1.msra.mxu0 0.0
        %2465 = vmatprep.subr.mxu0 0.0
        %2466 = vmatpush1.msra.mxu0 0.0
        %2467 = vmatprep.subr.mxu0 0.0
        %2468 = vmatpush1.msra.mxu0 0.0
        %2469 = vmatprep.subr.mxu0 0.0
        %2470 = vmatpush1.msra.mxu0 0.0
        %2471 = vmatprep.subr.mxu0 0.0
        %2472 = vmatpush1.msra.mxu0 0.0
        %2473 = vmatprep.subr.mxu0 0.0
        %2474 = vmatpush1.msra.mxu0 0.0
        %2475 = vmatprep.subr.mxu0 0.0
        %2476 = vmatpush1.msra.mxu0 0.0
        %2477 = vmatprep.subr.mxu0 0.0
        %2478 = vmatpush1.msra.mxu0 0.0
        %2479 = vmatprep.subr.mxu0 0.0
        %2480 = vmatpush1.msra.mxu0 0.0
        %2481 = vmatprep.subr.mxu0 0.0
        %2482 = vmatpush1.msra.mxu0 0.0
        %2483 = vmatprep.subr.mxu0 0.0
        %2484 = vmatpush1.msra.mxu0 0.0
        %2485 = vmatprep.subr.mxu0 0.0
        %2486 = vmatpush1.msra.mxu0 0.0
        %2487 = vmatprep.subr.mxu0 0.0
        %2488 = vmatpush1.msra.mxu0 0.0
        %2489 = vmatprep.subr.mxu0 0.0
        %2490 = vmatpush1.msra.mxu0 0.0
        %2491 = vmatprep.subr.mxu0 0.0
        %2492 = vmatpush1.msra.mxu0 0.0
        %2493 = vmatprep.subr.mxu0 0.0
        %2494 = vmatpush1.msra.mxu0 0.0
        %2495 = vmatprep.subr.mxu0 0.0
        %2496 = vmatpush1.msra.mxu0 0.0
        %2497 = vmatprep.subr.mxu0 0.0
        %2498 = vmatpush1.msra.mxu0 0.0
        %2499 = vmatprep.subr.mxu0 0.0
        %2500 = vmatpush1.msra.mxu0 0.0
        %2501 = vmatprep.subr.mxu0 0.0
        %2502 = vmatpush1.msra.mxu0 0.0
        %2503 = vmatprep.subr.mxu0 0.0
        %2504 = vmatpush1.msra.mxu0 0.0
        %2505 = vmatprep.subr.mxu0 0.0
        %2506 = vmatpush1.msra.mxu0 0.0
        %2507 = vmatprep.subr.mxu0 0.0
        %2508 = vmatpush1.msra.mxu0 0.0
        %2509 = vmatprep.subr.mxu0 0.0
        %2510 = vmatpush1.msra.mxu0 0.0
        %2511 = vmatprep.subr.mxu0 0.0
        %2512 = vmatpush1.msra.mxu0 0.0
        %2513 = vmatprep.subr.mxu0 0.0
        %2514 = vmatpush1.msra.mxu0 0.0
        %2515 = vmatprep.subr.mxu0 0.0
        %2516 = vmatpush1.msra.mxu0 0.0
        %2517 = vmatprep.subr.mxu0 0.0
        %2518 = vmatpush1.msra.mxu0 0.0
        %2519 = vmatprep.mubr.f32.mxu0 0.0
        %2520 = vmatmul.mubr.f32.gmra.mrb[0].mxu0 %v2444
        %v2521 = vpop.f32.mrb[0].mxu0
        %v2522 = vadd.f32 %v2441, %v2521
        %v2523 = vpop.f32.mrb[0].mxu0
        %2524 = vmatprep.mubr.f32.mxu0 0.0
        %2525 = vmatmul.mubr.f32.gmra.mrb[0].mxu0 %v2447
        %v2526 = vpop.f32.mrb[0].mxu0
        %v2527 = vadd.f32 %v2441, %v2526
        %v2528 = vpop.f32.mrb[0].mxu0
        %2529 = vmatprep.mubr.f32.mxu0 0.0
        %2530 = vmatmul.mubr.f32.gmra.mrb[0].mxu0 %v2450
        %v2531 = vpop.f32.mrb[0].mxu0
        %v2532 = vadd.f32 %v2441, %v2531
        %v2533 = vpop.f32.mrb[0].mxu0
        %2534 = vmatprep.mubr.f32.mxu0 0.0
        %2535 = vmatmul.mubr.f32.gmra.mrb[0].mxu0 %v2453
        %v2536 = vpop.f32.mrb[0].mxu0
        %v2537 = vadd.f32 %v2441, %v2536
        %v2538 = vpop.f32.mrb[0].mxu0
        %2539 = vdwg.mxu0
        %v2540 = vxor.u32 %v2522, 2147483648
        %v2541 = vxor.u32 %v2527, 2147483648
        %v2542 = vxor.u32 %v2532, 2147483648
        %v2543 = vxor.u32 %v2537, 2147483648
        %v2544 = vmul.f32 %v2540, 1.442695
        %v2545 = vpow.pop %v2544
        %v2546 = vmul.f32 %v2541, 1.442695
        %v2547 = vpow.pop %v2546
        %v2548 = vmul.f32 %v2542, 1.442695
        %v2549 = vpow.pop %v2548
        %v2550 = vmul.f32 %v2543, 1.442695
        %v2551 = vpow.pop %v2550
        %v2552 = vadd.f32 %v2545, 1.0
        %v2553 = vadd.f32 %v2547, 1.0
        %v2554 = vadd.f32 %v2549, 1.0
        %v2555 = vadd.f32 %v2551, 1.0
        %v2556 = vrcp.pop %v2552
        %v2557 = vmul.f32 1.0, %v2556
        %v2558 = vrcp.pop %v2553
        %v2559 = vmul.f32 1.0, %v2558
        %v2560 = vrcp.pop %v2554
        %v2561 = vmul.f32 1.0, %v2560
        %v2562 = vrcp.pop %v2555
        %v2563 = vmul.f32 1.0, %v2562
        %v2564 = vmul.f32 %v2522, %v2557
        %v2565 = vmul.f32 %v2527, %v2559
        %v2566 = vmul.f32 %v2532, %v2561
        %v2567 = vmul.f32 %v2537, %v2563
        %v2568 = vld [vmem:[%s620] sm:$0xff]
        %v2569 = vld [vmem:[%s620 + $0x8] sm:$0xff]
        %v2570 = vld [vmem:[%s620 + $0x10] sm:$0xff]
        %v2571 = vld [vmem:[%s620 + $0x18] sm:$0xff]
        %v2572 = vld [vmem:[%s620 + $0x20] sm:$0xff]
        %v2573 = vld [vmem:[%s620 + $0x28] sm:$0xff]
        %v2574 = vld [vmem:[%s620 + $0x30] sm:$0xff]
        %v2575 = vld [vmem:[%s620 + $0x38] sm:$0xff]
        %v2576 = vld [vmem:[%s623] sm:$0x1]
        %v2578 = vlaneseq
        %v2579 = vshrl.u32 %v2578, 7
        %v2580 = vsub.s32 0, %v2579
        %v2581 = vrot.slane %v2576, %v2580
        %vm2583 = vcmask 523264
        %v2585 = vsel %vm2583, %v2564, 0
        %v2588 = vsel %vm2583, %v2565, 0
        %v2591 = vsel %vm2583, %v2566, 0
        %v2594 = vsel %vm2583, %v2567, 0
        %2596 = vmatprep.subr.mxu0 0.0
        %2597 = vmatpush1.msra.mxu0 %v2568
        %2598 = vmatprep.subr.mxu0 0.0
        %2599 = vmatpush1.msra.mxu0 %v2569
        %2600 = vmatprep.subr.mxu0 0.0
        %2601 = vmatpush1.msra.mxu0 %v2570
        %2602 = vmatprep.subr.mxu0 0.0
        %2603 = vmatpush1.msra.mxu0 %v2571
        %2604 = vmatprep.subr.mxu0 0.0
        %2605 = vmatpush1.msra.mxu0 %v2572
        %2606 = vmatprep.subr.mxu0 0.0
        %2607 = vmatpush1.msra.mxu0 %v2573
        %2608 = vmatprep.subr.mxu0 0.0
        %2609 = vmatpush1.msra.mxu0 %v2574
        %2610 = vmatprep.subr.mxu0 0.0
        %2611 = vmatpush1.msra.mxu0 %v2575
        %2612 = vmatprep.subr.mxu0 0.0
        %2613 = vmatpush1.msra.mxu0 0.0
        %2614 = vmatprep.subr.mxu0 0.0
        %2615 = vmatpush1.msra.mxu0 0.0
        %2616 = vmatprep.subr.mxu0 0.0
        %2617 = vmatpush1.msra.mxu0 0.0
        %2618 = vmatprep.subr.mxu0 0.0
        %2619 = vmatpush1.msra.mxu0 0.0
        %2620 = vmatprep.subr.mxu0 0.0
        %2621 = vmatpush1.msra.mxu0 0.0
        %2622 = vmatprep.subr.mxu0 0.0
        %2623 = vmatpush1.msra.mxu0 0.0
        %2624 = vmatprep.subr.mxu0 0.0
        %2625 = vmatpush1.msra.mxu0 0.0
        %2626 = vmatprep.subr.mxu0 0.0
        %2627 = vmatpush1.msra.mxu0 0.0
        %2628 = vmatprep.subr.mxu0 0.0
        %2629 = vmatpush1.msra.mxu0 0.0
        %2630 = vmatprep.subr.mxu0 0.0
        %2631 = vmatpush1.msra.mxu0 0.0
        %2632 = vmatprep.subr.mxu0 0.0
        %2633 = vmatpush1.msra.mxu0 0.0
        %2634 = vmatprep.subr.mxu0 0.0
        %2635 = vmatpush1.msra.mxu0 0.0
        %2636 = vmatprep.subr.mxu0 0.0
        %2637 = vmatpush1.msra.mxu0 0.0
        %2638 = vmatprep.subr.mxu0 0.0
        %2639 = vmatpush1.msra.mxu0 0.0
        %2640 = vmatprep.subr.mxu0 0.0
        %2641 = vmatpush1.msra.mxu0 0.0
        %2642 = vmatprep.subr.mxu0 0.0
        %2643 = vmatpush1.msra.mxu0 0.0
        %2644 = vmatprep.subr.mxu0 0.0
        %2645 = vmatpush1.msra.mxu0 0.0
        %2646 = vmatprep.subr.mxu0 0.0
        %2647 = vmatpush1.msra.mxu0 0.0
        %2648 = vmatprep.subr.mxu0 0.0
        %2649 = vmatpush1.msra.mxu0 0.0
        %2650 = vmatprep.subr.mxu0 0.0
        %2651 = vmatpush1.msra.mxu0 0.0
        %2652 = vmatprep.subr.mxu0 0.0
        %2653 = vmatpush1.msra.mxu0 0.0
        %2654 = vmatprep.subr.mxu0 0.0
        %2655 = vmatpush1.msra.mxu0 0.0
        %2656 = vmatprep.subr.mxu0 0.0
        %2657 = vmatpush1.msra.mxu0 0.0
        %2658 = vmatprep.subr.mxu0 0.0
        %2659 = vmatpush1.msra.mxu0 0.0
        %2660 = vmatprep.mubr.f32.mxu0 0.0
        %2661 = vmatmul.mubr.f32.gmra.mrb[0].mxu0 %v2585
        %v2662 = vpop.f32.mrb[0].mxu0
        %v2663 = vadd.f32 %v2581, %v2662
        %v2664 = vpop.f32.mrb[0].mxu0
        %2665 = vmatprep.mubr.f32.mxu0 0.0
        %2666 = vmatmul.mubr.f32.gmra.mrb[0].mxu0 %v2588
        %v2667 = vpop.f32.mrb[0].mxu0
        %v2668 = vadd.f32 %v2581, %v2667
        %v2669 = vpop.f32.mrb[0].mxu0
        %2670 = vmatprep.mubr.f32.mxu0 0.0
        %2671 = vmatmul.mubr.f32.gmra.mrb[0].mxu0 %v2591
        %v2672 = vpop.f32.mrb[0].mxu0
        %v2673 = vadd.f32 %v2581, %v2672
        %v2674 = vpop.f32.mrb[0].mxu0
        %2675 = vmatprep.mubr.f32.mxu0 0.0
        %2676 = vmatmul.mubr.f32.gmra.mrb[0].mxu0 %v2594
        %v2677 = vpop.f32.mrb[0].mxu0
        %v2678 = vadd.f32 %v2581, %v2677
        %v2679 = vpop.f32.mrb[0].mxu0
        %2680 = vdwg.mxu0
        %v2681 = vadd.f32 %v2354, %v2663
        %v2682 = vadd.f32 %v2355, %v2668
        %v2683 = vadd.f32 %v2356, %v2673
        %v2684 = vadd.f32 %v2357, %v2678
        %2685 = vst.msk [vmem:[%s581] sm:$0xff] %vm644, %v2681
        %2686 = vst.msk [vmem:[%s581 + $0x8] sm:$0xff] %vm644, %v2682
        %2687 = vst.msk [vmem:[%s581 + $0x10] sm:$0xff] %vm644, %v2683
        %2688 = vst.msk [vmem:[%s581 + $0x18] sm:$0xff] %vm644, %v2684
        %s2689 = sand.u32 %s361, 1
        %s2690 = scalar_lea.sflag [#allocation4], %s2689
        %s2691 = sand.u32 %s361, 1
        %s2692 = smul.addr %s2691, 32
        %s2693 = scalar_lea.vmem [#allocation5], %s2692
        // Predicated region
        $region77: #{tpu_custom_call.1} parent=67 // pred_check
          %p2694 = pneg %p371
        $region78: #{tpu_custom_call.1} parent=67 // pred_check_branch
          %2696 = sbr.rel (%p2694) target = $region80
        $region79: #{tpu_custom_call.1} parent=67 // pred_region
          %s2697 = smul.u32 4, %s33
          %s2699 = ssub.s32 512, 512
          %2700 = vsyncadd %s2690, %s2699
          %s2701 = smul.addr %s2697, 128
          %s2702 = scalar_lea.hbm %s12, %s2701
          %s2703 = sshll.u32 %s2693, 4
          %s2704 = int_to_ptr.vmem [resolvable:$true] %s2703
          %2709 = dma.vmem_to_hbm [thread:$0]  %s2704, 512, %s2702, %s2690, 128, 128, 8
        $region80: #{tpu_custom_call.1} parent=67 // pred_fallthru
          _
      $region68: #{tpu_custom_call.1} parent=5 // pred_fallthru
        _
      %p2710 = scmp.le.s32.totalorder 2, %s24
      // Predicated region
      $region81: #{tpu_custom_call.1} parent=5 // pred_check
        %p2711 = pneg %p2710
      $region82: #{tpu_custom_call.1} parent=5 // pred_check_branch
        %2713 = sbr.rel (%p2711) target = $region84
      $region83: #{tpu_custom_call.1} parent=5 // pred_region
        %s2714 = ssub.s32 %s24, 2
        // Predicated region
        $region85: #{tpu_custom_call.1} parent=83 // pred_check
          %p2715 = pneg %p377
        $region86: #{tpu_custom_call.1} parent=83 // pred_check_branch
          %2717 = sbr.rel (%p2715) target = $region88
        $region87: #{tpu_custom_call.1} parent=83 // pred_region
          %s2718 = sand.u32 %s362, 1
          %s2719 = scalar_lea.sflag [#allocation4], %s2718
          %s2720 = sand.u32 %s362, 1
          %s2721 = smul.addr %s2720, 32
          %s2722 = scalar_lea.vmem [#allocation5], %s2721
          %2723 = dma.done %s2719, 512
        $region88: #{tpu_custom_call.1} parent=83 // pred_fallthru
          _
      $region84: #{tpu_custom_call.1} parent=5 // pred_fallthru
        _
    $region6: #{tpu_custom_call.1} parent=1 // loop_footer
      %s28 = sadd.s32 1, %s24
    $region7: #{tpu_custom_call.1} parent=1 // loop_footer_branch
      %23 = sbr.rel target = $region3
    $region8: #{tpu_custom_call.1} parent=1 // loop_exit
      _
    %2724 = vsyncpa [#allocation3], 1
    %s2725 = scalar_lea.sflag [#allocation3], 1
    %2726 = vsyncpa %s2725, 1
    %2727 = vsyncpa [#allocation4], 1
    %s2728 = scalar_lea.sflag [#allocation4], 1
    %2729 = vsyncpa %s2728, 1

</llo_original>
